<compile_context>
chip_gen: v7x
topology: tpu7x:2x2x1
jax: 0.10.0
libtpu: 0.0.40
codegen_flags: <defaults>
</compile_context>

<pallas_src>
import functools

import jax
import jax.numpy as jnp
from jax import lax
from jax.experimental import pallas as pl
from jax.experimental.pallas import tpu as pltpu

HIDDEN1 = 64   # dense1 output width / LSTM input width
H = 32         # LSTM hidden size per direction (bidirectional -> 2*H = 64)


def actor_kernel(x_ref,                      # (T*B, Din)           time-major, flattened
                 w1_ref, b1_ref,             # (Din, 64), (1, 64)
                 wih_ref, bih_ref,           # (64, 8H), (1, 8H)    [fwd | bwd], gate order (i,f,o,g)
                 whhf_ref, whhb_ref,         # (H, 4H) each         gate order (i,f,o,g)
                 w2f_ref, w2b_ref, b2_ref,   # (H, out), (H, out), (1, out)
                 out_ref,                    # (T*B, out)
                 xgf_ref, xgb_ref,           # scratch (T*B, 4H) each: input->gate contributions
                 hf_ref, hb_ref,             # scratch (T*B, H) each: per-direction hidden states
                 *, T, B):
    # --- batched (time-distributed) dense1 + relu: one MXU pass over all T*B rows ---
    h1 = jnp.maximum(
        jnp.dot(x_ref[...], w1_ref[...], preferred_element_type=jnp.float32)
        + b1_ref[...], 0.0)                                          # (T*B, 64)

    # --- precompute input->gate contributions for BOTH directions at once ---
    # (combined LSTM bias b_ih + b_hh is folded in here, so the loop has no bias adds)
    xg = jnp.dot(h1, wih_ref[...], preferred_element_type=jnp.float32) + bih_ref[...]
    xgf_ref[...] = xg[:, :4 * H]
    xgb_ref[...] = xg[:, 4 * H:]

    whh_f = whhf_ref[...]
    whh_b = whhb_ref[...]

    h_f = jnp.zeros((B, H), jnp.float32)
    c_f = jnp.zeros((B, H), jnp.float32)
    h_b = jnp.zeros((B, H), jnp.float32)
    c_b = jnp.zeros((B, H), jnp.float32)

    def cell(gates, c_prev):
        # gate column order is (i, f, o, g): one sigmoid over the contiguous (B, 3H)
        sg = jax.nn.sigmoid(gates[:, :3 * H])
        g = jnp.tanh(gates[:, 3 * H:])
        c = sg[:, H:2 * H] * c_prev + sg[:, :H] * g
        h = sg[:, 2 * H:3 * H] * jnp.tanh(c)
        return h, c

    # --- fused, fully-unrolled recurrence: fwd direction at t=step, bwd at t=T-1-step ---
    for step in range(T):
        rf = step * B
        rb = (T - 1 - step) * B
        gates_f = (xgf_ref[pl.ds(rf, B), :]
                   + jnp.dot(h_f, whh_f, preferred_element_type=jnp.float32))
        gates_b = (xgb_ref[pl.ds(rb, B), :]
                   + jnp.dot(h_b, whh_b, preferred_element_type=jnp.float32))
        h_f, c_f = cell(gates_f, c_f)
        h_b, c_b = cell(gates_b, c_b)
        hf_ref[pl.ds(rf, B), :] = h_f
        hb_ref[pl.ds(rb, B), :] = h_b

    # --- batched relu -> dense2 -> softmax, single lane-dense output store ---
    # relu(concat(hf, hb)) @ w2 == relu(hf) @ w2[:H] + relu(hb) @ w2[H:]  (split matmuls)
    hf = jnp.maximum(hf_ref[...], 0.0)
    hb = jnp.maximum(hb_ref[...], 0.0)
    logits = (jnp.dot(hf, w2f_ref[...], preferred_element_type=jnp.float32)
              + jnp.dot(hb, w2b_ref[...], preferred_element_type=jnp.float32)
              + b2_ref[...])
    logits = logits - jnp.max(logits, axis=-1, keepdims=True)
    e = jnp.exp(logits)
    out_ref[...] = (e / jnp.sum(e, axis=-1, keepdims=True)).astype(out_ref.dtype)


def _reorder_gates(w):
    """Permute last-dim gate blocks from PyTorch (i, f, g, o) to kernel (i, f, o, g)."""
    i, f, g, o = jnp.split(w, 4, axis=-1)
    return jnp.concatenate([i, f, o, g], axis=-1)


def actor_forward(obs, params):
    """obs: (B, T, input_dim) float32  ->  (B, T, out_dim) softmax probs."""
    B, T, Din = obs.shape
    out_dim = params["w2"].shape[1]

    # Pack canonical (PyTorch-semantics) params into the fused kernel layout.
    wih = jnp.concatenate([_reorder_gates(params["wih_f"]),
                           _reorder_gates(params["wih_b"])], axis=1)   # (64, 8H)
    bih = jnp.concatenate([_reorder_gates(params["b_f"]),
                           _reorder_gates(params["b_b"])], axis=1)     # (1, 8H)
    whh_f = _reorder_gates(params["whh_f"])                            # (H, 4H)
    whh_b = _reorder_gates(params["whh_b"])                            # (H, 4H)
    w2f = params["w2"][:H]                                             # (H, out)
    w2b = params["w2"][H:]                                             # (H, out)

    # Time-major, flattened input: row t*B + b.
    x2d = jnp.transpose(obs, (1, 0, 2)).reshape(T * B, Din).astype(jnp.float32)

    kernel = functools.partial(actor_kernel, T=T, B=B)
    out2d = pl.pallas_call(
        kernel,
        out_shape=jax.ShapeDtypeStruct((T * B, out_dim), jnp.float32),
        in_specs=[pl.BlockSpec(memory_space=pltpu.MemorySpace.VMEM)] * 10,
        out_specs=pl.BlockSpec(memory_space=pltpu.MemorySpace.VMEM),
        scratch_shapes=[
            pltpu.VMEM((T * B, 4 * H), jnp.float32),   # fwd input->gate contributions
            pltpu.VMEM((T * B, 4 * H), jnp.float32),   # bwd input->gate contributions
            pltpu.VMEM((T * B, H), jnp.float32),       # fwd hidden states
            pltpu.VMEM((T * B, H), jnp.float32),       # bwd hidden states
        ],
    )(x2d, params["w1"], params["b1"], wih, bih, whh_f, whh_b, w2f, w2b, params["b2"])

    # TODO(synk): on v7x a batch-parallel grid could put one sequence per TensorCore,
    # but on single-TC chips (v5e/v6e) it would serialize the recurrence, so it is
    # intentionally not used at these sizes.
    return jnp.transpose(out2d.reshape(T, B, out_dim), (1, 0, 2))      # (B, T, out)


def init_params(key, input_dim, out_dim):
    """Canonical params in PyTorch semantics: (in, out) layout, gate order (i,f,g,o),
    LSTM biases b_ih + b_hh pre-summed."""
    ks = jax.random.split(key, 11)

    def u(k, shape, fan_in):
        s = 1.0 / float(fan_in) ** 0.5
        return jax.random.uniform(k, shape, jnp.float32, -s, s)

    return {
        "w1":    u(ks[0], (input_dim, HIDDEN1), input_dim),
        "b1":    u(ks[1], (1, HIDDEN1), input_dim),
        "wih_f": u(ks[2], (HIDDEN1, 4 * H), H),
        "whh_f": u(ks[3], (H, 4 * H), H),
        "b_f":   u(ks[4], (1, 4 * H), H),            # b_ih + b_hh combined
        "wih_b": u(ks[5], (HIDDEN1, 4 * H), H),
        "whh_b": u(ks[6], (H, 4 * H), H),
        "b_b":   u(ks[7], (1, 4 * H), H),            # b_ih + b_hh combined
        "w2":    u(ks[8], (2 * H, out_dim), 2 * H),
        "b2":    u(ks[9], (1, out_dim), 2 * H),
    }


def reference_forward(obs, p):
    """Pure-JAX reference matching PyTorch semantics, used for validation."""
    B, T, _ = obs.shape
    h1 = jax.nn.relu(obs @ p["w1"] + p["b1"][0])                  # (B, T, 64)
    xs = jnp.transpose(h1, (1, 0, 2))                             # (T, B, 64)

    def run_dir(wih, whh, b, seq):
        def step(carry, x_t):
            h_prev, c_prev = carry
            gates = x_t @ wih + h_prev @ whh + b[0]
            i, f, g, o = jnp.split(gates, 4, axis=-1)
            i = jax.nn.sigmoid(i)
            f = jax.nn.sigmoid(f)
            g = jnp.tanh(g)
            o = jax.nn.sigmoid(o)
            c = f * c_prev + i * g
            h = o * jnp.tanh(c)
            return (h, c), h
        init = (jnp.zeros((B, H), jnp.float32), jnp.zeros((B, H), jnp.float32))
        _, hs = lax.scan(step, init, seq)
        return hs                                                 # (T, B, H)

    hf = run_dir(p["wih_f"], p["whh_f"], p["b_f"], xs)
    hb = run_dir(p["wih_b"], p["whh_b"], p["b_b"], xs[::-1])[::-1]
    h = jnp.concatenate([hf, hb], axis=-1)                        # (T, B, 64)
    h = jax.nn.relu(jnp.transpose(h, (1, 0, 2)))                  # (B, T, 64)
    logits = h @ p["w2"] + p["b2"][0]
    return jax.nn.softmax(logits, axis=-1)


if __name__ == "__main__":
    B, T, INPUT_DIM, OUT_DIM = 2, 8, 16, 6

    key = jax.random.PRNGKey(0)
    k_obs, k_params = jax.random.split(key)
    obs = jax.random.normal(k_obs, (B, T, INPUT_DIM), jnp.float32)
    params = init_params(k_params, INPUT_DIM, OUT_DIM)

    out = jax.block_until_ready(actor_forward(obs, params))
    ref = jax.block_until_ready(reference_forward(obs, params))

    assert out.shape == (B, T, OUT_DIM), out.shape
    assert jnp.allclose(out, ref, atol=1e-5, rtol=1e-5), (
        f"max abs diff {jnp.max(jnp.abs(out - ref))}")
    print("KERNEL_OK")
</pallas_src>

<mosaic_0001>
module attributes {stable_mosaic.version = 11 : i64} {
  func.func @actor_kernel(%arg0: memref<16x16xf32, #tpu.memory_space<vmem>>, %arg1: memref<16x64xf32, #tpu.memory_space<vmem>>, %arg2: memref<1x64xf32, #tpu.memory_space<vmem>>, %arg3: memref<64x256xf32, #tpu.memory_space<vmem>>, %arg4: memref<1x256xf32, #tpu.memory_space<vmem>>, %arg5: memref<32x128xf32, #tpu.memory_space<vmem>>, %arg6: memref<32x128xf32, #tpu.memory_space<vmem>>, %arg7: memref<32x6xf32, #tpu.memory_space<vmem>>, %arg8: memref<32x6xf32, #tpu.memory_space<vmem>>, %arg9: memref<1x6xf32, #tpu.memory_space<vmem>>, %arg10: memref<16x6xf32, #tpu.memory_space<vmem>>, %arg11: memref<16x128xf32, #tpu.memory_space<vmem>>, %arg12: memref<16x128xf32, #tpu.memory_space<vmem>>, %arg13: memref<16x32xf32, #tpu.memory_space<vmem>>, %arg14: memref<16x32xf32, #tpu.memory_space<vmem>>) attributes {dimension_semantics = [], scalar_prefetch = 0 : i64, scratch_operands = 4 : i64, tpu.core_type = #tpu.core_type<tc>} {
    %c0 = arith.constant 0 : index
    %c0_0 = arith.constant 0 : index
    %0 = vector.load %arg0[%c0, %c0_0] : memref<16x16xf32, #tpu.memory_space<vmem>>, vector<16x16xf32>
    %c0_1 = arith.constant 0 : index
    %c0_2 = arith.constant 0 : index
    %1 = vector.load %arg1[%c0_1, %c0_2] : memref<16x64xf32, #tpu.memory_space<vmem>>, vector<16x64xf32>
    %cst = arith.constant dense<0.000000e+00> : vector<16x64xf32>
    %2 = tpu.matmul %0, %1, %cst {dimension_numbers = #tpu.dot_dimension_numbers<[1], [0], [0], [1], [0, 0, 1, 1], [], []>} : vector<16x16xf32>, vector<16x64xf32>, vector<16x64xf32> -> vector<16x64xf32>
    %c0_3 = arith.constant 0 : index
    %c0_4 = arith.constant 0 : index
    %3 = vector.load %arg2[%c0_3, %c0_4] : memref<1x64xf32, #tpu.memory_space<vmem>>, vector<1x64xf32>
    %4 = vector.broadcast %3 : vector<1x64xf32> to vector<16x64xf32>
    %5 = arith.addf %2, %4 : vector<16x64xf32>
    %cst_5 = arith.constant 0.000000e+00 : f32
    %6 = vector.broadcast %cst_5 : f32 to vector<16x64xf32>
    %7 = arith.maximumf %5, %6 : vector<16x64xf32>
    %c0_6 = arith.constant 0 : index
    %c0_7 = arith.constant 0 : index
    %8 = vector.load %arg3[%c0_6, %c0_7] : memref<64x256xf32, #tpu.memory_space<vmem>>, vector<64x256xf32>
    %cst_8 = arith.constant dense<0.000000e+00> : vector<16x256xf32>
    %9 = tpu.matmul %7, %8, %cst_8 {dimension_numbers = #tpu.dot_dimension_numbers<[1], [0], [0], [1], [0, 0, 1, 1], [], []>} : vector<16x64xf32>, vector<64x256xf32>, vector<16x256xf32> -> vector<16x256xf32>
    %c0_9 = arith.constant 0 : index
    %c0_10 = arith.constant 0 : index
    %10 = vector.load %arg4[%c0_9, %c0_10] : memref<1x256xf32, #tpu.memory_space<vmem>>, vector<1x256xf32>
    %11 = vector.broadcast %10 : vector<1x256xf32> to vector<16x256xf32>
    %12 = arith.addf %9, %11 : vector<16x256xf32>
    %13 = vector.extract_strided_slice %12 {offsets = [0, 0], sizes = [16, 128], strides = [1, 1]} : vector<16x256xf32> to vector<16x128xf32>
    %c0_11 = arith.constant 0 : index
    %c0_12 = arith.constant 0 : index
    %14 = vector.load %arg11[%c0_11, %c0_12] : memref<16x128xf32, #tpu.memory_space<vmem>>, vector<16x128xf32>
    tpu.vector_store %arg11[%c0_11, %c0_12], %13 {strides = array<i32>} : memref<16x128xf32, #tpu.memory_space<vmem>>, vector<16x128xf32>,
    %15 = vector.extract_strided_slice %12 {offsets = [0, 128], sizes = [16, 128], strides = [1, 1]} : vector<16x256xf32> to vector<16x128xf32>
    %c0_13 = arith.constant 0 : index
    %c0_14 = arith.constant 0 : index
    %16 = vector.load %arg12[%c0_13, %c0_14] : memref<16x128xf32, #tpu.memory_space<vmem>>, vector<16x128xf32>
    tpu.vector_store %arg12[%c0_13, %c0_14], %15 {strides = array<i32>} : memref<16x128xf32, #tpu.memory_space<vmem>>, vector<16x128xf32>,
    %c0_15 = arith.constant 0 : index
    %c0_16 = arith.constant 0 : index
    %17 = vector.load %arg5[%c0_15, %c0_16] : memref<32x128xf32, #tpu.memory_space<vmem>>, vector<32x128xf32>
    %c0_17 = arith.constant 0 : index
    %c0_18 = arith.constant 0 : index
    %18 = vector.load %arg6[%c0_17, %c0_18] : memref<32x128xf32, #tpu.memory_space<vmem>>, vector<32x128xf32>
    %cst_19 = arith.constant 0.000000e+00 : f32
    %19 = vector.broadcast %cst_19 : f32 to vector<2x32xf32>
    %cst_20 = arith.constant 0.000000e+00 : f32
    %20 = vector.broadcast %cst_20 : f32 to vector<2x32xf32>
    %cst_21 = arith.constant 0.000000e+00 : f32
    %21 = vector.broadcast %cst_21 : f32 to vector<2x32xf32>
    %cst_22 = arith.constant 0.000000e+00 : f32
    %22 = vector.broadcast %cst_22 : f32 to vector<2x32xf32>
    %c0_23 = arith.constant 0 : index
    %c0_24 = arith.constant 0 : index
    %23 = vector.load %arg11[%c0_23, %c0_24] : memref<16x128xf32, #tpu.memory_space<vmem>>, vector<2x128xf32>
    %cst_25 = arith.constant dense<0.000000e+00> : vector<2x128xf32>
    %24 = tpu.matmul %19, %17, %cst_25 {dimension_numbers = #tpu.dot_dimension_numbers<[1], [0], [0], [1], [0, 0, 1, 1], [], []>} : vector<2x32xf32>, vector<32x128xf32>, vector<2x128xf32> -> vector<2x128xf32>
    %25 = arith.addf %23, %24 : vector<2x128xf32>
    %c14 = arith.constant 14 : index
    %c0_26 = arith.constant 0 : index
    %26 = vector.load %arg12[%c14, %c0_26] : memref<16x128xf32, #tpu.memory_space<vmem>>, vector<2x128xf32>
    %cst_27 = arith.constant dense<0.000000e+00> : vector<2x128xf32>
    %27 = tpu.matmul %21, %18, %cst_27 {dimension_numbers = #tpu.dot_dimension_numbers<[1], [0], [0], [1], [0, 0, 1, 1], [], []>} : vector<2x32xf32>, vector<32x128xf32>, vector<2x128xf32> -> vector<2x128xf32>
    %28 = arith.addf %26, %27 : vector<2x128xf32>
    %29 = vector.extract_strided_slice %25 {offsets = [0, 0], sizes = [2, 96], strides = [1, 1]} : vector<2x128xf32> to vector<2x96xf32>
    %30 = arith.negf %29 : vector<2x96xf32>
    %31 = math.exp %30 : vector<2x96xf32>
    %cst_28 = arith.constant 1.000000e+00 : f32
    %32 = vector.broadcast %cst_28 : f32 to vector<2x96xf32>
    %33 = arith.addf %32, %31 : vector<2x96xf32>
    %34 = arith.divf %32, %33 : vector<2x96xf32>
    %35 = vector.extract_strided_slice %25 {offsets = [0, 96], sizes = [2, 32], strides = [1, 1]} : vector<2x128xf32> to vector<2x32xf32>
    %36 = math.tanh %35 : vector<2x32xf32>
    %37 = vector.extract_strided_slice %34 {offsets = [0, 32], sizes = [2, 32], strides = [1, 1]} : vector<2x96xf32> to vector<2x32xf32>
    %38 = arith.mulf %37, %20 : vector<2x32xf32>
    %39 = vector.extract_strided_slice %34 {offsets = [0, 0], sizes = [2, 32], strides = [1, 1]} : vector<2x96xf32> to vector<2x32xf32>
    %40 = arith.mulf %39, %36 : vector<2x32xf32>
    %41 = arith.addf %38, %40 : vector<2x32xf32>
    %42 = vector.extract_strided_slice %34 {offsets = [0, 64], sizes = [2, 32], strides = [1, 1]} : vector<2x96xf32> to vector<2x32xf32>
    %43 = math.tanh %41 : vector<2x32xf32>
    %44 = arith.mulf %42, %43 : vector<2x32xf32>
    %45 = vector.extract_strided_slice %28 {offsets = [0, 0], sizes = [2, 96], strides = [1, 1]} : vector<2x128xf32> to vector<2x96xf32>
    %46 = arith.negf %45 : vector<2x96xf32>
    %47 = math.exp %46 : vector<2x96xf32>
    %cst_29 = arith.constant 1.000000e+00 : f32
    %48 = vector.broadcast %cst_29 : f32 to vector<2x96xf32>
    %49 = arith.addf %48, %47 : vector<2x96xf32>
    %50 = arith.divf %48, %49 : vector<2x96xf32>
    %51 = vector.extract_strided_slice %28 {offsets = [0, 96], sizes = [2, 32], strides = [1, 1]} : vector<2x128xf32> to vector<2x32xf32>
    %52 = math.tanh %51 : vector<2x32xf32>
    %53 = vector.extract_strided_slice %50 {offsets = [0, 32], sizes = [2, 32], strides = [1, 1]} : vector<2x96xf32> to vector<2x32xf32>
    %54 = arith.mulf %53, %22 : vector<2x32xf32>
    %55 = vector.extract_strided_slice %50 {offsets = [0, 0], sizes = [2, 32], strides = [1, 1]} : vector<2x96xf32> to vector<2x32xf32>
    %56 = arith.mulf %55, %52 : vector<2x32xf32>
    %57 = arith.addf %54, %56 : vector<2x32xf32>
    %58 = vector.extract_strided_slice %50 {offsets = [0, 64], sizes = [2, 32], strides = [1, 1]} : vector<2x96xf32> to vector<2x32xf32>
    %59 = math.tanh %57 : vector<2x32xf32>
    %60 = arith.mulf %58, %59 : vector<2x32xf32>
    %c0_30 = arith.constant 0 : index
    %c0_31 = arith.constant 0 : index
    %61 = vector.load %arg13[%c0_30, %c0_31] : memref<16x32xf32, #tpu.memory_space<vmem>>, vector<2x32xf32>
    tpu.vector_store %arg13[%c0_30, %c0_31], %44 {strides = array<i32>} : memref<16x32xf32, #tpu.memory_space<vmem>>, vector<2x32xf32>,
    %c14_32 = arith.constant 14 : index
    %c0_33 = arith.constant 0 : index
    %62 = vector.load %arg14[%c14_32, %c0_33] : memref<16x32xf32, #tpu.memory_space<vmem>>, vector<2x32xf32>
    tpu.vector_store %arg14[%c14_32, %c0_33], %60 {strides = array<i32>} : memref<16x32xf32, #tpu.memory_space<vmem>>, vector<2x32xf32>,
    %c2 = arith.constant 2 : index
    %c0_34 = arith.constant 0 : index
    %63 = vector.load %arg11[%c2, %c0_34] : memref<16x128xf32, #tpu.memory_space<vmem>>, vector<2x128xf32>
    %cst_35 = arith.constant dense<0.000000e+00> : vector<2x128xf32>
    %64 = tpu.matmul %44, %17, %cst_35 {dimension_numbers = #tpu.dot_dimension_numbers<[1], [0], [0], [1], [0, 0, 1, 1], [], []>} : vector<2x32xf32>, vector<32x128xf32>, vector<2x128xf32> -> vector<2x128xf32>
    %65 = arith.addf %63, %64 : vector<2x128xf32>
    %c12 = arith.constant 12 : index
    %c0_36 = arith.constant 0 : index
    %66 = vector.load %arg12[%c12, %c0_36] : memref<16x128xf32, #tpu.memory_space<vmem>>, vector<2x128xf32>
    %cst_37 = arith.constant dense<0.000000e+00> : vector<2x128xf32>
    %67 = tpu.matmul %60, %18, %cst_37 {dimension_numbers = #tpu.dot_dimension_numbers<[1], [0], [0], [1], [0, 0, 1, 1], [], []>} : vector<2x32xf32>, vector<32x128xf32>, vector<2x128xf32> -> vector<2x128xf32>
    %68 = arith.addf %66, %67 : vector<2x128xf32>
    %69 = vector.extract_strided_slice %65 {offsets = [0, 0], sizes = [2, 96], strides = [1, 1]} : vector<2x128xf32> to vector<2x96xf32>
    %70 = arith.negf %69 : vector<2x96xf32>
    %71 = math.exp %70 : vector<2x96xf32>
    %cst_38 = arith.constant 1.000000e+00 : f32
    %72 = vector.broadcast %cst_38 : f32 to vector<2x96xf32>
    %73 = arith.addf %72, %71 : vector<2x96xf32>
    %74 = arith.divf %72, %73 : vector<2x96xf32>
    %75 = vector.extract_strided_slice %65 {offsets = [0, 96], sizes = [2, 32], strides = [1, 1]} : vector<2x128xf32> to vector<2x32xf32>
    %76 = math.tanh %75 : vector<2x32xf32>
    %77 = vector.extract_strided_slice %74 {offsets = [0, 32], sizes = [2, 32], strides = [1, 1]} : vector<2x96xf32> to vector<2x32xf32>
    %78 = arith.mulf %77, %41 : vector<2x32xf32>
    %79 = vector.extract_strided_slice %74 {offsets = [0, 0], sizes = [2, 32], strides = [1, 1]} : vector<2x96xf32> to vector<2x32xf32>
    %80 = arith.mulf %79, %76 : vector<2x32xf32>
    %81 = arith.addf %78, %80 : vector<2x32xf32>
    %82 = vector.extract_strided_slice %74 {offsets = [0, 64], sizes = [2, 32], strides = [1, 1]} : vector<2x96xf32> to vector<2x32xf32>
    %83 = math.tanh %81 : vector<2x32xf32>
    %84 = arith.mulf %82, %83 : vector<2x32xf32>
    %85 = vector.extract_strided_slice %68 {offsets = [0, 0], sizes = [2, 96], strides = [1, 1]} : vector<2x128xf32> to vector<2x96xf32>
    %86 = arith.negf %85 : vector<2x96xf32>
    %87 = math.exp %86 : vector<2x96xf32>
    %cst_39 = arith.constant 1.000000e+00 : f32
    %88 = vector.broadcast %cst_39 : f32 to vector<2x96xf32>
    %89 = arith.addf %88, %87 : vector<2x96xf32>
    %90 = arith.divf %88, %89 : vector<2x96xf32>
    %91 = vector.extract_strided_slice %68 {offsets = [0, 96], sizes = [2, 32], strides = [1, 1]} : vector<2x128xf32> to vector<2x32xf32>
    %92 = math.tanh %91 : vector<2x32xf32>
    %93 = vector.extract_strided_slice %90 {offsets = [0, 32], sizes = [2, 32], strides = [1, 1]} : vector<2x96xf32> to vector<2x32xf32>
    %94 = arith.mulf %93, %57 : vector<2x32xf32>
    %95 = vector.extract_strided_slice %90 {offsets = [0, 0], sizes = [2, 32], strides = [1, 1]} : vector<2x96xf32> to vector<2x32xf32>
    %96 = arith.mulf %95, %92 : vector<2x32xf32>
    %97 = arith.addf %94, %96 : vector<2x32xf32>
    %98 = vector.extract_strided_slice %90 {offsets = [0, 64], sizes = [2, 32], strides = [1, 1]} : vector<2x96xf32> to vector<2x32xf32>
    %99 = math.tanh %97 : vector<2x32xf32>
    %100 = arith.mulf %98, %99 : vector<2x32xf32>
    %c2_40 = arith.constant 2 : index
    %c0_41 = arith.constant 0 : index
    %101 = vector.load %arg13[%c2_40, %c0_41] : memref<16x32xf32, #tpu.memory_space<vmem>>, vector<2x32xf32>
    tpu.vector_store %arg13[%c2_40, %c0_41], %84 {strides = array<i32>} : memref<16x32xf32, #tpu.memory_space<vmem>>, vector<2x32xf32>,
    %c12_42 = arith.constant 12 : index
    %c0_43 = arith.constant 0 : index
    %102 = vector.load %arg14[%c12_42, %c0_43] : memref<16x32xf32, #tpu.memory_space<vmem>>, vector<2x32xf32>
    tpu.vector_store %arg14[%c12_42, %c0_43], %100 {strides = array<i32>} : memref<16x32xf32, #tpu.memory_space<vmem>>, vector<2x32xf32>,
    %c4 = arith.constant 4 : index
    %c0_44 = arith.constant 0 : index
    %103 = vector.load %arg11[%c4, %c0_44] : memref<16x128xf32, #tpu.memory_space<vmem>>, vector<2x128xf32>
    %cst_45 = arith.constant dense<0.000000e+00> : vector<2x128xf32>
    %104 = tpu.matmul %84, %17, %cst_45 {dimension_numbers = #tpu.dot_dimension_numbers<[1], [0], [0], [1], [0, 0, 1, 1], [], []>} : vector<2x32xf32>, vector<32x128xf32>, vector<2x128xf32> -> vector<2x128xf32>
    %105 = arith.addf %103, %104 : vector<2x128xf32>
    %c10 = arith.constant 10 : index
    %c0_46 = arith.constant 0 : index
    %106 = vector.load %arg12[%c10, %c0_46] : memref<16x128xf32, #tpu.memory_space<vmem>>, vector<2x128xf32>
    %cst_47 = arith.constant dense<0.000000e+00> : vector<2x128xf32>
    %107 = tpu.matmul %100, %18, %cst_47 {dimension_numbers = #tpu.dot_dimension_numbers<[1], [0], [0], [1], [0, 0, 1, 1], [], []>} : vector<2x32xf32>, vector<32x128xf32>, vector<2x128xf32> -> vector<2x128xf32>
    %108 = arith.addf %106, %107 : vector<2x128xf32>
    %109 = vector.extract_strided_slice %105 {offsets = [0, 0], sizes = [2, 96], strides = [1, 1]} : vector<2x128xf32> to vector<2x96xf32>
    %110 = arith.negf %109 : vector<2x96xf32>
    %111 = math.exp %110 : vector<2x96xf32>
    %cst_48 = arith.constant 1.000000e+00 : f32
    %112 = vector.broadcast %cst_48 : f32 to vector<2x96xf32>
    %113 = arith.addf %112, %111 : vector<2x96xf32>
    %114 = arith.divf %112, %113 : vector<2x96xf32>
    %115 = vector.extract_strided_slice %105 {offsets = [0, 96], sizes = [2, 32], strides = [1, 1]} : vector<2x128xf32> to vector<2x32xf32>
    %116 = math.tanh %115 : vector<2x32xf32>
    %117 = vector.extract_strided_slice %114 {offsets = [0, 32], sizes = [2, 32], strides = [1, 1]} : vector<2x96xf32> to vector<2x32xf32>
    %118 = arith.mulf %117, %81 : vector<2x32xf32>
    %119 = vector.extract_strided_slice %114 {offsets = [0, 0], sizes = [2, 32], strides = [1, 1]} : vector<2x96xf32> to vector<2x32xf32>
    %120 = arith.mulf %119, %116 : vector<2x32xf32>
    %121 = arith.addf %118, %120 : vector<2x32xf32>
    %122 = vector.extract_strided_slice %114 {offsets = [0, 64], sizes = [2, 32], strides = [1, 1]} : vector<2x96xf32> to vector<2x32xf32>
    %123 = math.tanh %121 : vector<2x32xf32>
    %124 = arith.mulf %122, %123 : vector<2x32xf32>
    %125 = vector.extract_strided_slice %108 {offsets = [0, 0], sizes = [2, 96], strides = [1, 1]} : vector<2x128xf32> to vector<2x96xf32>
    %126 = arith.negf %125 : vector<2x96xf32>
    %127 = math.exp %126 : vector<2x96xf32>
    %cst_49 = arith.constant 1.000000e+00 : f32
    %128 = vector.broadcast %cst_49 : f32 to vector<2x96xf32>
    %129 = arith.addf %128, %127 : vector<2x96xf32>
    %130 = arith.divf %128, %129 : vector<2x96xf32>
    %131 = vector.extract_strided_slice %108 {offsets = [0, 96], sizes = [2, 32], strides = [1, 1]} : vector<2x128xf32> to vector<2x32xf32>
    %132 = math.tanh %131 : vector<2x32xf32>
    %133 = vector.extract_strided_slice %130 {offsets = [0, 32], sizes = [2, 32], strides = [1, 1]} : vector<2x96xf32> to vector<2x32xf32>
    %134 = arith.mulf %133, %97 : vector<2x32xf32>
    %135 = vector.extract_strided_slice %130 {offsets = [0, 0], sizes = [2, 32], strides = [1, 1]} : vector<2x96xf32> to vector<2x32xf32>
    %136 = arith.mulf %135, %132 : vector<2x32xf32>
    %137 = arith.addf %134, %136 : vector<2x32xf32>
    %138 = vector.extract_strided_slice %130 {offsets = [0, 64], sizes = [2, 32], strides = [1, 1]} : vector<2x96xf32> to vector<2x32xf32>
    %139 = math.tanh %137 : vector<2x32xf32>
    %140 = arith.mulf %138, %139 : vector<2x32xf32>
    %c4_50 = arith.constant 4 : index
    %c0_51 = arith.constant 0 : index
    %141 = vector.load %arg13[%c4_50, %c0_51] : memref<16x32xf32, #tpu.memory_space<vmem>>, vector<2x32xf32>
    tpu.vector_store %arg13[%c4_50, %c0_51], %124 {strides = array<i32>} : memref<16x32xf32, #tpu.memory_space<vmem>>, vector<2x32xf32>,
    %c10_52 = arith.constant 10 : index
    %c0_53 = arith.constant 0 : index
    %142 = vector.load %arg14[%c10_52, %c0_53] : memref<16x32xf32, #tpu.memory_space<vmem>>, vector<2x32xf32>
    tpu.vector_store %arg14[%c10_52, %c0_53], %140 {strides = array<i32>} : memref<16x32xf32, #tpu.memory_space<vmem>>, vector<2x32xf32>,
    %c6 = arith.constant 6 : index
    %c0_54 = arith.constant 0 : index
    %143 = vector.load %arg11[%c6, %c0_54] : memref<16x128xf32, #tpu.memory_space<vmem>>, vector<2x128xf32>
    %cst_55 = arith.constant dense<0.000000e+00> : vector<2x128xf32>
    %144 = tpu.matmul %124, %17, %cst_55 {dimension_numbers = #tpu.dot_dimension_numbers<[1], [0], [0], [1], [0, 0, 1, 1], [], []>} : vector<2x32xf32>, vector<32x128xf32>, vector<2x128xf32> -> vector<2x128xf32>
    %145 = arith.addf %143, %144 : vector<2x128xf32>
    %c8 = arith.constant 8 : index
    %c0_56 = arith.constant 0 : index
    %146 = vector.load %arg12[%c8, %c0_56] : memref<16x128xf32, #tpu.memory_space<vmem>>, vector<2x128xf32>
    %cst_57 = arith.constant dense<0.000000e+00> : vector<2x128xf32>
    %147 = tpu.matmul %140, %18, %cst_57 {dimension_numbers = #tpu.dot_dimension_numbers<[1], [0], [0], [1], [0, 0, 1, 1], [], []>} : vector<2x32xf32>, vector<32x128xf32>, vector<2x128xf32> -> vector<2x128xf32>
    %148 = arith.addf %146, %147 : vector<2x128xf32>
    %149 = vector.extract_strided_slice %145 {offsets = [0, 0], sizes = [2, 96], strides = [1, 1]} : vector<2x128xf32> to vector<2x96xf32>
    %150 = arith.negf %149 : vector<2x96xf32>
    %151 = math.exp %150 : vector<2x96xf32>
    %cst_58 = arith.constant 1.000000e+00 : f32
    %152 = vector.broadcast %cst_58 : f32 to vector<2x96xf32>
    %153 = arith.addf %152, %151 : vector<2x96xf32>
    %154 = arith.divf %152, %153 : vector<2x96xf32>
    %155 = vector.extract_strided_slice %145 {offsets = [0, 96], sizes = [2, 32], strides = [1, 1]} : vector<2x128xf32> to vector<2x32xf32>
    %156 = math.tanh %155 : vector<2x32xf32>
    %157 = vector.extract_strided_slice %154 {offsets = [0, 32], sizes = [2, 32], strides = [1, 1]} : vector<2x96xf32> to vector<2x32xf32>
    %158 = arith.mulf %157, %121 : vector<2x32xf32>
    %159 = vector.extract_strided_slice %154 {offsets = [0, 0], sizes = [2, 32], strides = [1, 1]} : vector<2x96xf32> to vector<2x32xf32>
    %160 = arith.mulf %159, %156 : vector<2x32xf32>
    %161 = arith.addf %158, %160 : vector<2x32xf32>
    %162 = vector.extract_strided_slice %154 {offsets = [0, 64], sizes = [2, 32], strides = [1, 1]} : vector<2x96xf32> to vector<2x32xf32>
    %163 = math.tanh %161 : vector<2x32xf32>
    %164 = arith.mulf %162, %163 : vector<2x32xf32>
    %165 = vector.extract_strided_slice %148 {offsets = [0, 0], sizes = [2, 96], strides = [1, 1]} : vector<2x128xf32> to vector<2x96xf32>
    %166 = arith.negf %165 : vector<2x96xf32>
    %167 = math.exp %166 : vector<2x96xf32>
    %cst_59 = arith.constant 1.000000e+00 : f32
    %168 = vector.broadcast %cst_59 : f32 to vector<2x96xf32>
    %169 = arith.addf %168, %167 : vector<2x96xf32>
    %170 = arith.divf %168, %169 : vector<2x96xf32>
    %171 = vector.extract_strided_slice %148 {offsets = [0, 96], sizes = [2, 32], strides = [1, 1]} : vector<2x128xf32> to vector<2x32xf32>
    %172 = math.tanh %171 : vector<2x32xf32>
    %173 = vector.extract_strided_slice %170 {offsets = [0, 32], sizes = [2, 32], strides = [1, 1]} : vector<2x96xf32> to vector<2x32xf32>
    %174 = arith.mulf %173, %137 : vector<2x32xf32>
    %175 = vector.extract_strided_slice %170 {offsets = [0, 0], sizes = [2, 32], strides = [1, 1]} : vector<2x96xf32> to vector<2x32xf32>
    %176 = arith.mulf %175, %172 : vector<2x32xf32>
    %177 = arith.addf %174, %176 : vector<2x32xf32>
    %178 = vector.extract_strided_slice %170 {offsets = [0, 64], sizes = [2, 32], strides = [1, 1]} : vector<2x96xf32> to vector<2x32xf32>
    %179 = math.tanh %177 : vector<2x32xf32>
    %180 = arith.mulf %178, %179 : vector<2x32xf32>
    %c6_60 = arith.constant 6 : index
    %c0_61 = arith.constant 0 : index
    %181 = vector.load %arg13[%c6_60, %c0_61] : memref<16x32xf32, #tpu.memory_space<vmem>>, vector<2x32xf32>
    tpu.vector_store %arg13[%c6_60, %c0_61], %164 {strides = array<i32>} : memref<16x32xf32, #tpu.memory_space<vmem>>, vector<2x32xf32>,
    %c8_62 = arith.constant 8 : index
    %c0_63 = arith.constant 0 : index
    %182 = vector.load %arg14[%c8_62, %c0_63] : memref<16x32xf32, #tpu.memory_space<vmem>>, vector<2x32xf32>
    tpu.vector_store %arg14[%c8_62, %c0_63], %180 {strides = array<i32>} : memref<16x32xf32, #tpu.memory_space<vmem>>, vector<2x32xf32>,
    %c8_64 = arith.constant 8 : index
    %c0_65 = arith.constant 0 : index
    %183 = vector.load %arg11[%c8_64, %c0_65] : memref<16x128xf32, #tpu.memory_space<vmem>>, vector<2x128xf32>
    %cst_66 = arith.constant dense<0.000000e+00> : vector<2x128xf32>
    %184 = tpu.matmul %164, %17, %cst_66 {dimension_numbers = #tpu.dot_dimension_numbers<[1], [0], [0], [1], [0, 0, 1, 1], [], []>} : vector<2x32xf32>, vector<32x128xf32>, vector<2x128xf32> -> vector<2x128xf32>
    %185 = arith.addf %183, %184 : vector<2x128xf32>
    %c6_67 = arith.constant 6 : index
    %c0_68 = arith.constant 0 : index
    %186 = vector.load %arg12[%c6_67, %c0_68] : memref<16x128xf32, #tpu.memory_space<vmem>>, vector<2x128xf32>
    %cst_69 = arith.constant dense<0.000000e+00> : vector<2x128xf32>
    %187 = tpu.matmul %180, %18, %cst_69 {dimension_numbers = #tpu.dot_dimension_numbers<[1], [0], [0], [1], [0, 0, 1, 1], [], []>} : vector<2x32xf32>, vector<32x128xf32>, vector<2x128xf32> -> vector<2x128xf32>
    %188 = arith.addf %186, %187 : vector<2x128xf32>
    %189 = vector.extract_strided_slice %185 {offsets = [0, 0], sizes = [2, 96], strides = [1, 1]} : vector<2x128xf32> to vector<2x96xf32>
    %190 = arith.negf %189 : vector<2x96xf32>
    %191 = math.exp %190 : vector<2x96xf32>
    %cst_70 = arith.constant 1.000000e+00 : f32
    %192 = vector.broadcast %cst_70 : f32 to vector<2x96xf32>
    %193 = arith.addf %192, %191 : vector<2x96xf32>
    %194 = arith.divf %192, %193 : vector<2x96xf32>
    %195 = vector.extract_strided_slice %185 {offsets = [0, 96], sizes = [2, 32], strides = [1, 1]} : vector<2x128xf32> to vector<2x32xf32>
    %196 = math.tanh %195 : vector<2x32xf32>
    %197 = vector.extract_strided_slice %194 {offsets = [0, 32], sizes = [2, 32], strides = [1, 1]} : vector<2x96xf32> to vector<2x32xf32>
    %198 = arith.mulf %197, %161 : vector<2x32xf32>
    %199 = vector.extract_strided_slice %194 {offsets = [0, 0], sizes = [2, 32], strides = [1, 1]} : vector<2x96xf32> to vector<2x32xf32>
    %200 = arith.mulf %199, %196 : vector<2x32xf32>
    %201 = arith.addf %198, %200 : vector<2x32xf32>
    %202 = vector.extract_strided_slice %194 {offsets = [0, 64], sizes = [2, 32], strides = [1, 1]} : vector<2x96xf32> to vector<2x32xf32>
    %203 = math.tanh %201 : vector<2x32xf32>
    %204 = arith.mulf %202, %203 : vector<2x32xf32>
    %205 = vector.extract_strided_slice %188 {offsets = [0, 0], sizes = [2, 96], strides = [1, 1]} : vector<2x128xf32> to vector<2x96xf32>
    %206 = arith.negf %205 : vector<2x96xf32>
    %207 = math.exp %206 : vector<2x96xf32>
    %cst_71 = arith.constant 1.000000e+00 : f32
    %208 = vector.broadcast %cst_71 : f32 to vector<2x96xf32>
    %209 = arith.addf %208, %207 : vector<2x96xf32>
    %210 = arith.divf %208, %209 : vector<2x96xf32>
    %211 = vector.extract_strided_slice %188 {offsets = [0, 96], sizes = [2, 32], strides = [1, 1]} : vector<2x128xf32> to vector<2x32xf32>
    %212 = math.tanh %211 : vector<2x32xf32>
    %213 = vector.extract_strided_slice %210 {offsets = [0, 32], sizes = [2, 32], strides = [1, 1]} : vector<2x96xf32> to vector<2x32xf32>
    %214 = arith.mulf %213, %177 : vector<2x32xf32>
    %215 = vector.extract_strided_slice %210 {offsets = [0, 0], sizes = [2, 32], strides = [1, 1]} : vector<2x96xf32> to vector<2x32xf32>
    %216 = arith.mulf %215, %212 : vector<2x32xf32>
    %217 = arith.addf %214, %216 : vector<2x32xf32>
    %218 = vector.extract_strided_slice %210 {offsets = [0, 64], sizes = [2, 32], strides = [1, 1]} : vector<2x96xf32> to vector<2x32xf32>
    %219 = math.tanh %217 : vector<2x32xf32>
    %220 = arith.mulf %218, %219 : vector<2x32xf32>
    %c8_72 = arith.constant 8 : index
    %c0_73 = arith.constant 0 : index
    %221 = vector.load %arg13[%c8_72, %c0_73] : memref<16x32xf32, #tpu.memory_space<vmem>>, vector<2x32xf32>
    tpu.vector_store %arg13[%c8_72, %c0_73], %204 {strides = array<i32>} : memref<16x32xf32, #tpu.memory_space<vmem>>, vector<2x32xf32>,
    %c6_74 = arith.constant 6 : index
    %c0_75 = arith.constant 0 : index
    %222 = vector.load %arg14[%c6_74, %c0_75] : memref<16x32xf32, #tpu.memory_space<vmem>>, vector<2x32xf32>
    tpu.vector_store %arg14[%c6_74, %c0_75], %220 {strides = array<i32>} : memref<16x32xf32, #tpu.memory_space<vmem>>, vector<2x32xf32>,
    %c10_76 = arith.constant 10 : index
    %c0_77 = arith.constant 0 : index
    %223 = vector.load %arg11[%c10_76, %c0_77] : memref<16x128xf32, #tpu.memory_space<vmem>>, vector<2x128xf32>
    %cst_78 = arith.constant dense<0.000000e+00> : vector<2x128xf32>
    %224 = tpu.matmul %204, %17, %cst_78 {dimension_numbers = #tpu.dot_dimension_numbers<[1], [0], [0], [1], [0, 0, 1, 1], [], []>} : vector<2x32xf32>, vector<32x128xf32>, vector<2x128xf32> -> vector<2x128xf32>
    %225 = arith.addf %223, %224 : vector<2x128xf32>
    %c4_79 = arith.constant 4 : index
    %c0_80 = arith.constant 0 : index
    %226 = vector.load %arg12[%c4_79, %c0_80] : memref<16x128xf32, #tpu.memory_space<vmem>>, vector<2x128xf32>
    %cst_81 = arith.constant dense<0.000000e+00> : vector<2x128xf32>
    %227 = tpu.matmul %220, %18, %cst_81 {dimension_numbers = #tpu.dot_dimension_numbers<[1], [0], [0], [1], [0, 0, 1, 1], [], []>} : vector<2x32xf32>, vector<32x128xf32>, vector<2x128xf32> -> vector<2x128xf32>
    %228 = arith.addf %226, %227 : vector<2x128xf32>
    %229 = vector.extract_strided_slice %225 {offsets = [0, 0], sizes = [2, 96], strides = [1, 1]} : vector<2x128xf32> to vector<2x96xf32>
    %230 = arith.negf %229 : vector<2x96xf32>
    %231 = math.exp %230 : vector<2x96xf32>
    %cst_82 = arith.constant 1.000000e+00 : f32
    %232 = vector.broadcast %cst_82 : f32 to vector<2x96xf32>
    %233 = arith.addf %232, %231 : vector<2x96xf32>
    %234 = arith.divf %232, %233 : vector<2x96xf32>
    %235 = vector.extract_strided_slice %225 {offsets = [0, 96], sizes = [2, 32], strides = [1, 1]} : vector<2x128xf32> to vector<2x32xf32>
    %236 = math.tanh %235 : vector<2x32xf32>
    %237 = vector.extract_strided_slice %234 {offsets = [0, 32], sizes = [2, 32], strides = [1, 1]} : vector<2x96xf32> to vector<2x32xf32>
    %238 = arith.mulf %237, %201 : vector<2x32xf32>
    %239 = vector.extract_strided_slice %234 {offsets = [0, 0], sizes = [2, 32], strides = [1, 1]} : vector<2x96xf32> to vector<2x32xf32>
    %240 = arith.mulf %239, %236 : vector<2x32xf32>
    %241 = arith.addf %238, %240 : vector<2x32xf32>
    %242 = vector.extract_strided_slice %234 {offsets = [0, 64], sizes = [2, 32], strides = [1, 1]} : vector<2x96xf32> to vector<2x32xf32>
    %243 = math.tanh %241 : vector<2x32xf32>
    %244 = arith.mulf %242, %243 : vector<2x32xf32>
    %245 = vector.extract_strided_slice %228 {offsets = [0, 0], sizes = [2, 96], strides = [1, 1]} : vector<2x128xf32> to vector<2x96xf32>
    %246 = arith.negf %245 : vector<2x96xf32>
    %247 = math.exp %246 : vector<2x96xf32>
    %cst_83 = arith.constant 1.000000e+00 : f32
    %248 = vector.broadcast %cst_83 : f32 to vector<2x96xf32>
    %249 = arith.addf %248, %247 : vector<2x96xf32>
    %250 = arith.divf %248, %249 : vector<2x96xf32>
    %251 = vector.extract_strided_slice %228 {offsets = [0, 96], sizes = [2, 32], strides = [1, 1]} : vector<2x128xf32> to vector<2x32xf32>
    %252 = math.tanh %251 : vector<2x32xf32>
    %253 = vector.extract_strided_slice %250 {offsets = [0, 32], sizes = [2, 32], strides = [1, 1]} : vector<2x96xf32> to vector<2x32xf32>
    %254 = arith.mulf %253, %217 : vector<2x32xf32>
    %255 = vector.extract_strided_slice %250 {offsets = [0, 0], sizes = [2, 32], strides = [1, 1]} : vector<2x96xf32> to vector<2x32xf32>
    %256 = arith.mulf %255, %252 : vector<2x32xf32>
    %257 = arith.addf %254, %256 : vector<2x32xf32>
    %258 = vector.extract_strided_slice %250 {offsets = [0, 64], sizes = [2, 32], strides = [1, 1]} : vector<2x96xf32> to vector<2x32xf32>
    %259 = math.tanh %257 : vector<2x32xf32>
    %260 = arith.mulf %258, %259 : vector<2x32xf32>
    %c10_84 = arith.constant 10 : index
    %c0_85 = arith.constant 0 : index
    %261 = vector.load %arg13[%c10_84, %c0_85] : memref<16x32xf32, #tpu.memory_space<vmem>>, vector<2x32xf32>
    tpu.vector_store %arg13[%c10_84, %c0_85], %244 {strides = array<i32>} : memref<16x32xf32, #tpu.memory_space<vmem>>, vector<2x32xf32>,
    %c4_86 = arith.constant 4 : index
    %c0_87 = arith.constant 0 : index
    %262 = vector.load %arg14[%c4_86, %c0_87] : memref<16x32xf32, #tpu.memory_space<vmem>>, vector<2x32xf32>
    tpu.vector_store %arg14[%c4_86, %c0_87], %260 {strides = array<i32>} : memref<16x32xf32, #tpu.memory_space<vmem>>, vector<2x32xf32>,
    %c12_88 = arith.constant 12 : index
    %c0_89 = arith.constant 0 : index
    %263 = vector.load %arg11[%c12_88, %c0_89] : memref<16x128xf32, #tpu.memory_space<vmem>>, vector<2x128xf32>
    %cst_90 = arith.constant dense<0.000000e+00> : vector<2x128xf32>
    %264 = tpu.matmul %244, %17, %cst_90 {dimension_numbers = #tpu.dot_dimension_numbers<[1], [0], [0], [1], [0, 0, 1, 1], [], []>} : vector<2x32xf32>, vector<32x128xf32>, vector<2x128xf32> -> vector<2x128xf32>
    %265 = arith.addf %263, %264 : vector<2x128xf32>
    %c2_91 = arith.constant 2 : index
    %c0_92 = arith.constant 0 : index
    %266 = vector.load %arg12[%c2_91, %c0_92] : memref<16x128xf32, #tpu.memory_space<vmem>>, vector<2x128xf32>
    %cst_93 = arith.constant dense<0.000000e+00> : vector<2x128xf32>
    %267 = tpu.matmul %260, %18, %cst_93 {dimension_numbers = #tpu.dot_dimension_numbers<[1], [0], [0], [1], [0, 0, 1, 1], [], []>} : vector<2x32xf32>, vector<32x128xf32>, vector<2x128xf32> -> vector<2x128xf32>
    %268 = arith.addf %266, %267 : vector<2x128xf32>
    %269 = vector.extract_strided_slice %265 {offsets = [0, 0], sizes = [2, 96], strides = [1, 1]} : vector<2x128xf32> to vector<2x96xf32>
    %270 = arith.negf %269 : vector<2x96xf32>
    %271 = math.exp %270 : vector<2x96xf32>
    %cst_94 = arith.constant 1.000000e+00 : f32
    %272 = vector.broadcast %cst_94 : f32 to vector<2x96xf32>
    %273 = arith.addf %272, %271 : vector<2x96xf32>
    %274 = arith.divf %272, %273 : vector<2x96xf32>
    %275 = vector.extract_strided_slice %265 {offsets = [0, 96], sizes = [2, 32], strides = [1, 1]} : vector<2x128xf32> to vector<2x32xf32>
    %276 = math.tanh %275 : vector<2x32xf32>
    %277 = vector.extract_strided_slice %274 {offsets = [0, 32], sizes = [2, 32], strides = [1, 1]} : vector<2x96xf32> to vector<2x32xf32>
    %278 = arith.mulf %277, %241 : vector<2x32xf32>
    %279 = vector.extract_strided_slice %274 {offsets = [0, 0], sizes = [2, 32], strides = [1, 1]} : vector<2x96xf32> to vector<2x32xf32>
    %280 = arith.mulf %279, %276 : vector<2x32xf32>
    %281 = arith.addf %278, %280 : vector<2x32xf32>
    %282 = vector.extract_strided_slice %274 {offsets = [0, 64], sizes = [2, 32], strides = [1, 1]} : vector<2x96xf32> to vector<2x32xf32>
    %283 = math.tanh %281 : vector<2x32xf32>
    %284 = arith.mulf %282, %283 : vector<2x32xf32>
    %285 = vector.extract_strided_slice %268 {offsets = [0, 0], sizes = [2, 96], strides = [1, 1]} : vector<2x128xf32> to vector<2x96xf32>
    %286 = arith.negf %285 : vector<2x96xf32>
    %287 = math.exp %286 : vector<2x96xf32>
    %cst_95 = arith.constant 1.000000e+00 : f32
    %288 = vector.broadcast %cst_95 : f32 to vector<2x96xf32>
    %289 = arith.addf %288, %287 : vector<2x96xf32>
    %290 = arith.divf %288, %289 : vector<2x96xf32>
    %291 = vector.extract_strided_slice %268 {offsets = [0, 96], sizes = [2, 32], strides = [1, 1]} : vector<2x128xf32> to vector<2x32xf32>
    %292 = math.tanh %291 : vector<2x32xf32>
    %293 = vector.extract_strided_slice %290 {offsets = [0, 32], sizes = [2, 32], strides = [1, 1]} : vector<2x96xf32> to vector<2x32xf32>
    %294 = arith.mulf %293, %257 : vector<2x32xf32>
    %295 = vector.extract_strided_slice %290 {offsets = [0, 0], sizes = [2, 32], strides = [1, 1]} : vector<2x96xf32> to vector<2x32xf32>
    %296 = arith.mulf %295, %292 : vector<2x32xf32>
    %297 = arith.addf %294, %296 : vector<2x32xf32>
    %298 = vector.extract_strided_slice %290 {offsets = [0, 64], sizes = [2, 32], strides = [1, 1]} : vector<2x96xf32> to vector<2x32xf32>
    %299 = math.tanh %297 : vector<2x32xf32>
    %300 = arith.mulf %298, %299 : vector<2x32xf32>
    %c12_96 = arith.constant 12 : index
    %c0_97 = arith.constant 0 : index
    %301 = vector.load %arg13[%c12_96, %c0_97] : memref<16x32xf32, #tpu.memory_space<vmem>>, vector<2x32xf32>
    tpu.vector_store %arg13[%c12_96, %c0_97], %284 {strides = array<i32>} : memref<16x32xf32, #tpu.memory_space<vmem>>, vector<2x32xf32>,
    %c2_98 = arith.constant 2 : index
    %c0_99 = arith.constant 0 : index
    %302 = vector.load %arg14[%c2_98, %c0_99] : memref<16x32xf32, #tpu.memory_space<vmem>>, vector<2x32xf32>
    tpu.vector_store %arg14[%c2_98, %c0_99], %300 {strides = array<i32>} : memref<16x32xf32, #tpu.memory_space<vmem>>, vector<2x32xf32>,
    %c14_100 = arith.constant 14 : index
    %c0_101 = arith.constant 0 : index
    %303 = vector.load %arg11[%c14_100, %c0_101] : memref<16x128xf32, #tpu.memory_space<vmem>>, vector<2x128xf32>
    %cst_102 = arith.constant dense<0.000000e+00> : vector<2x128xf32>
    %304 = tpu.matmul %284, %17, %cst_102 {dimension_numbers = #tpu.dot_dimension_numbers<[1], [0], [0], [1], [0, 0, 1, 1], [], []>} : vector<2x32xf32>, vector<32x128xf32>, vector<2x128xf32> -> vector<2x128xf32>
    %305 = arith.addf %303, %304 : vector<2x128xf32>
    %c0_103 = arith.constant 0 : index
    %c0_104 = arith.constant 0 : index
    %306 = vector.load %arg12[%c0_103, %c0_104] : memref<16x128xf32, #tpu.memory_space<vmem>>, vector<2x128xf32>
    %cst_105 = arith.constant dense<0.000000e+00> : vector<2x128xf32>
    %307 = tpu.matmul %300, %18, %cst_105 {dimension_numbers = #tpu.dot_dimension_numbers<[1], [0], [0], [1], [0, 0, 1, 1], [], []>} : vector<2x32xf32>, vector<32x128xf32>, vector<2x128xf32> -> vector<2x128xf32>
    %308 = arith.addf %306, %307 : vector<2x128xf32>
    %309 = vector.extract_strided_slice %305 {offsets = [0, 0], sizes = [2, 96], strides = [1, 1]} : vector<2x128xf32> to vector<2x96xf32>
    %310 = arith.negf %309 : vector<2x96xf32>
    %311 = math.exp %310 : vector<2x96xf32>
    %cst_106 = arith.constant 1.000000e+00 : f32
    %312 = vector.broadcast %cst_106 : f32 to vector<2x96xf32>
    %313 = arith.addf %312, %311 : vector<2x96xf32>
    %314 = arith.divf %312, %313 : vector<2x96xf32>
    %315 = vector.extract_strided_slice %305 {offsets = [0, 96], sizes = [2, 32], strides = [1, 1]} : vector<2x128xf32> to vector<2x32xf32>
    %316 = math.tanh %315 : vector<2x32xf32>
    %317 = vector.extract_strided_slice %314 {offsets = [0, 32], sizes = [2, 32], strides = [1, 1]} : vector<2x96xf32> to vector<2x32xf32>
    %318 = arith.mulf %317, %281 : vector<2x32xf32>
    %319 = vector.extract_strided_slice %314 {offsets = [0, 0], sizes = [2, 32], strides = [1, 1]} : vector<2x96xf32> to vector<2x32xf32>
    %320 = arith.mulf %319, %316 : vector<2x32xf32>
    %321 = arith.addf %318, %320 : vector<2x32xf32>
    %322 = vector.extract_strided_slice %314 {offsets = [0, 64], sizes = [2, 32], strides = [1, 1]} : vector<2x96xf32> to vector<2x32xf32>
    %323 = math.tanh %321 : vector<2x32xf32>
    %324 = arith.mulf %322, %323 : vector<2x32xf32>
    %325 = vector.extract_strided_slice %308 {offsets = [0, 0], sizes = [2, 96], strides = [1, 1]} : vector<2x128xf32> to vector<2x96xf32>
    %326 = arith.negf %325 : vector<2x96xf32>
    %327 = math.exp %326 : vector<2x96xf32>
    %cst_107 = arith.constant 1.000000e+00 : f32
    %328 = vector.broadcast %cst_107 : f32 to vector<2x96xf32>
    %329 = arith.addf %328, %327 : vector<2x96xf32>
    %330 = arith.divf %328, %329 : vector<2x96xf32>
    %331 = vector.extract_strided_slice %308 {offsets = [0, 96], sizes = [2, 32], strides = [1, 1]} : vector<2x128xf32> to vector<2x32xf32>
    %332 = math.tanh %331 : vector<2x32xf32>
    %333 = vector.extract_strided_slice %330 {offsets = [0, 32], sizes = [2, 32], strides = [1, 1]} : vector<2x96xf32> to vector<2x32xf32>
    %334 = arith.mulf %333, %297 : vector<2x32xf32>
    %335 = vector.extract_strided_slice %330 {offsets = [0, 0], sizes = [2, 32], strides = [1, 1]} : vector<2x96xf32> to vector<2x32xf32>
    %336 = arith.mulf %335, %332 : vector<2x32xf32>
    %337 = arith.addf %334, %336 : vector<2x32xf32>
    %338 = vector.extract_strided_slice %330 {offsets = [0, 64], sizes = [2, 32], strides = [1, 1]} : vector<2x96xf32> to vector<2x32xf32>
    %339 = math.tanh %337 : vector<2x32xf32>
    %340 = arith.mulf %338, %339 : vector<2x32xf32>
    %c14_108 = arith.constant 14 : index
    %c0_109 = arith.constant 0 : index
    %341 = vector.load %arg13[%c14_108, %c0_109] : memref<16x32xf32, #tpu.memory_space<vmem>>, vector<2x32xf32>
    tpu.vector_store %arg13[%c14_108, %c0_109], %324 {strides = array<i32>} : memref<16x32xf32, #tpu.memory_space<vmem>>, vector<2x32xf32>,
    %c0_110 = arith.constant 0 : index
    %c0_111 = arith.constant 0 : index
    %342 = vector.load %arg14[%c0_110, %c0_111] : memref<16x32xf32, #tpu.memory_space<vmem>>, vector<2x32xf32>
    tpu.vector_store %arg14[%c0_110, %c0_111], %340 {strides = array<i32>} : memref<16x32xf32, #tpu.memory_space<vmem>>, vector<2x32xf32>,
    %c0_112 = arith.constant 0 : index
    %c0_113 = arith.constant 0 : index
    %343 = vector.load %arg13[%c0_112, %c0_113] : memref<16x32xf32, #tpu.memory_space<vmem>>, vector<16x32xf32>
    %cst_114 = arith.constant 0.000000e+00 : f32
    %344 = vector.broadcast %cst_114 : f32 to vector<16x32xf32>
    %345 = arith.maximumf %343, %344 : vector<16x32xf32>
    %c0_115 = arith.constant 0 : index
    %c0_116 = arith.constant 0 : index
    %346 = vector.load %arg14[%c0_115, %c0_116] : memref<16x32xf32, #tpu.memory_space<vmem>>, vector<16x32xf32>
    %cst_117 = arith.constant 0.000000e+00 : f32
    %347 = vector.broadcast %cst_117 : f32 to vector<16x32xf32>
    %348 = arith.maximumf %346, %347 : vector<16x32xf32>
    %c0_118 = arith.constant 0 : index
    %c0_119 = arith.constant 0 : index
    %349 = vector.load %arg7[%c0_118, %c0_119] : memref<32x6xf32, #tpu.memory_space<vmem>>, vector<32x6xf32>
    %cst_120 = arith.constant dense<0.000000e+00> : vector<16x6xf32>
    %350 = tpu.matmul %345, %349, %cst_120 {dimension_numbers = #tpu.dot_dimension_numbers<[1], [0], [0], [1], [0, 0, 1, 1], [], []>} : vector<16x32xf32>, vector<32x6xf32>, vector<16x6xf32> -> vector<16x6xf32>
    %c0_121 = arith.constant 0 : index
    %c0_122 = arith.constant 0 : index
    %351 = vector.load %arg8[%c0_121, %c0_122] : memref<32x6xf32, #tpu.memory_space<vmem>>, vector<32x6xf32>
    %cst_123 = arith.constant dense<0.000000e+00> : vector<16x6xf32>
    %352 = tpu.matmul %348, %351, %cst_123 {dimension_numbers = #tpu.dot_dimension_numbers<[1], [0], [0], [1], [0, 0, 1, 1], [], []>} : vector<16x32xf32>, vector<32x6xf32>, vector<16x6xf32> -> vector<16x6xf32>
    %353 = arith.addf %350, %352 : vector<16x6xf32>
    %c0_124 = arith.constant 0 : index
    %c0_125 = arith.constant 0 : index
    %354 = vector.load %arg9[%c0_124, %c0_125] : memref<1x6xf32, #tpu.memory_space<vmem>>, vector<1x6xf32>
    %355 = vector.broadcast %354 : vector<1x6xf32> to vector<16x6xf32>
    %356 = arith.addf %353, %355 : vector<16x6xf32>
    %cst_126 = arith.constant dense<0xFF800000> : vector<16xf32>
    %357 = vector.multi_reduction <maximumf>, %356, %cst_126 [1] : vector<16x6xf32> to vector<16xf32>
    %358 = vector.shape_cast %357 : vector<16xf32> to vector<16x1xf32>
    %359 = vector.broadcast %358 : vector<16x1xf32> to vector<16x6xf32>
    %360 = arith.subf %356, %359 : vector<16x6xf32>
    %361 = math.exp %360 : vector<16x6xf32>
    %cst_127 = arith.constant dense<0.000000e+00> : vector<16xf32>
    %362 = vector.multi_reduction <add>, %361, %cst_127 [1] : vector<16x6xf32> to vector<16xf32>
    %363 = vector.shape_cast %362 : vector<16xf32> to vector<16x1xf32>
    %364 = vector.broadcast %363 : vector<16x1xf32> to vector<16x6xf32>
    %365 = arith.divf %361, %364 : vector<16x6xf32>
    %c0_128 = arith.constant 0 : index
    %c0_129 = arith.constant 0 : index
    %366 = vector.load %arg10[%c0_128, %c0_129] : memref<16x6xf32, #tpu.memory_space<vmem>>, vector<16x6xf32>
    tpu.vector_store %arg10[%c0_128, %c0_129], %365 {strides = array<i32>} : memref<16x6xf32, #tpu.memory_space<vmem>>, vector<16x6xf32>,
    return
  }
}

</mosaic_0001>

<llo_original>
// kernel: tpu_custom_call.1
$region0: #{tpu_custom_call.1}
  #allocation0 [shape = 'u32[]', space=smem, size = 0x4, offset = 0x4, fixed_abs, tag = 'smem constant byte address 0x4 - core index']
  #allocation1 [shape = 'u32[144,128]{1,0:T(1,128)}', space=vmem, size = 0x12000, scoped, tag = 'internal scratch']
  #allocation2 [shape = 'f32[16,128]{1,0:T(8,128)}', space=vmem, size = 0x2000, scoped, tag = 'scratch operand']
  #allocation3 [shape = 'f32[16,128]{1,0:T(8,128)}', space=vmem, size = 0x2000, scoped, tag = 'scratch operand']
  #allocation4 [shape = 'f32[16,32]{1,0:T(8,128)}', space=vmem, size = 0x2000, scoped, tag = 'scratch operand']
  #allocation5 [shape = 'f32[16,32]{1,0:T(8,128)}', space=vmem, size = 0x2000, scoped, tag = 'scratch operand']
  %s0 = inlined_call_operand.vmem [shape: f32[16,16], index: 0, kind: input, shape index: {}]
  %s1 = inlined_call_operand.hbm [shape: f32[16,64], index: 1, kind: input, shape index: {}]
  %s2 = inlined_call_operand.hbm [shape: f32[1,64], index: 2, kind: input, shape index: {}]
  %s3 = inlined_call_operand.hbm [shape: f32[64,256], index: 3, kind: input, shape index: {}]
  %s4 = inlined_call_operand.vmem [shape: f32[1,256], index: 4, kind: input, shape index: {}]
  %s5 = inlined_call_operand.vmem [shape: f32[32,128], index: 5, kind: input, shape index: {}]
  %s6 = inlined_call_operand.vmem [shape: f32[32,128], index: 6, kind: input, shape index: {}]
  %s7 = inlined_call_operand.vmem [shape: f32[32,6], index: 7, kind: input, shape index: {}]
  %s8 = inlined_call_operand.vmem [shape: f32[32,6], index: 8, kind: input, shape index: {}]
  %s9 = inlined_call_operand.vmem [shape: f32[1,6], index: 9, kind: input, shape index: {}]
  %s10 = inlined_call_operand.vmem [shape: f32[16,6], index: 10, kind: output, shape index: {}]
  %s11 = sld [smem:[#allocation0]]
  $region62: #{tpu_custom_call.1} parent=0
    _
  %s13 = ssub.s32 1, %s11
  %s14 = scalar_select 0, %s13, %s11
  $region1: #{tpu_custom_call.1} parent=0
    #allocation6 [shape = 'u8[8192]{0}', space=vmem, size = 0x2000, scoped, tag = 'input window, operand 1, single buffered']
    #allocation7 [shape = 's32[1]{0}', space=sflag, size = 0x4, scoped, tag = 'scoped memory for tpu_custom_call.1']
    #allocation8 [shape = 'u8[512]{0}', space=vmem, size = 0x400, scoped, tag = 'input window, operand 2, single buffered']
    #allocation9 [shape = 's32[1]{0}', space=sflag, size = 0x4, scoped, tag = 'scoped memory for tpu_custom_call.1']
    #allocation10 [shape = 'u8[65536]{0}', space=vmem, size = 0x10000, scoped, tag = 'input window, operand 3, single buffered']
    %15 = vsyncpa [#allocation7], 0
    %16 = vsyncpa [#allocation9], 0
    // Predicated region
    $region2: #{tpu_custom_call.1} parent=1 // pred_check
      _
    $region3: #{tpu_custom_call.1} parent=1 // pred_check_branch
      %18 = sbr.rel (0) target = $region5
    $region4: #{tpu_custom_call.1} parent=1 // pred_region
      _
    $region5: #{tpu_custom_call.1} parent=1 // pred_fallthru
      _
    // Predicated region
    $region6: #{tpu_custom_call.1} parent=1 // pred_check
      _
    $region7: #{tpu_custom_call.1} parent=1 // pred_check_branch
      %20 = sbr.rel (0) target = $region9
    $region8: #{tpu_custom_call.1} parent=1 // pred_region
      %s22 = ssub.s32 256, 256
      %23 = vsyncadd [#allocation7], %s22
      %s24 = sshll.u32 [#allocation6], 4
      %s25 = int_to_ptr.vmem [resolvable:$true] %s24
      %30 = dma.hbm_to_vmem [thread:$0]  %s1, 256, %s25, [#allocation7], 128, 128, 8
    $region9: #{tpu_custom_call.1} parent=1 // pred_fallthru
      _
    // Predicated region
    $region10: #{tpu_custom_call.1} parent=1 // pred_check
      _
    $region11: #{tpu_custom_call.1} parent=1 // pred_check_branch
      %32 = sbr.rel (0) target = $region13
    $region12: #{tpu_custom_call.1} parent=1 // pred_region
      %s34 = ssub.s32 16, 16
      %35 = vsyncadd [#allocation9], %s34
      %s37 = sshll.u32 [#allocation8], 4
      %s38 = int_to_ptr.vmem [resolvable:$true] %s37
      %40 = dma.hbm_to_vmem [thread:$0]  %s2, 16, %s38, [#allocation9]
    $region13: #{tpu_custom_call.1} parent=1 // pred_fallthru
      _
    // Predicated region
    $region14: #{tpu_custom_call.1} parent=1 // pred_check
      _
    $region15: #{tpu_custom_call.1} parent=1 // pred_check_branch
      %42 = sbr.rel (0) target = $region17
    $region16: #{tpu_custom_call.1} parent=1 // pred_region
      %s44 = ssub.s32 2048, 2048
      %45 = vsyncadd [#allocation9], %s44
      %s46 = sshll.u32 [#allocation10], 4
      %s47 = int_to_ptr.vmem [resolvable:$true] %s46
      %52 = dma.hbm_to_vmem [thread:$0]  %s3, 2048, %s47, [#allocation9], 256, 256, 16
    $region17: #{tpu_custom_call.1} parent=1 // pred_fallthru
      _
    // Predicated region
    $region18: #{tpu_custom_call.1} parent=1 // pred_check
      _
    $region19: #{tpu_custom_call.1} parent=1 // pred_check_branch
      %54 = sbr.rel (0) target = $region21
    $region20: #{tpu_custom_call.1} parent=1 // pred_region
      _
    $region21: #{tpu_custom_call.1} parent=1 // pred_fallthru
      _
    // Predicated region
    $region22: #{tpu_custom_call.1} parent=1 // pred_check
      _
    $region23: #{tpu_custom_call.1} parent=1 // pred_check_branch
      %56 = sbr.rel (0) target = $region25
    $region24: #{tpu_custom_call.1} parent=1 // pred_region
      _
    $region25: #{tpu_custom_call.1} parent=1 // pred_fallthru
      _
    // Predicated region
    $region26: #{tpu_custom_call.1} parent=1 // pred_check
      _
    $region27: #{tpu_custom_call.1} parent=1 // pred_check_branch
      %58 = sbr.rel (0) target = $region29
    $region28: #{tpu_custom_call.1} parent=1 // pred_region
      _
    $region29: #{tpu_custom_call.1} parent=1 // pred_fallthru
      _
    // Predicated region
    $region30: #{tpu_custom_call.1} parent=1 // pred_check
      _
    $region31: #{tpu_custom_call.1} parent=1 // pred_check_branch
      %60 = sbr.rel (0) target = $region33
    $region32: #{tpu_custom_call.1} parent=1 // pred_region
      _
    $region33: #{tpu_custom_call.1} parent=1 // pred_fallthru
      _
    // Predicated region
    $region34: #{tpu_custom_call.1} parent=1 // pred_check
      _
    $region35: #{tpu_custom_call.1} parent=1 // pred_check_branch
      %62 = sbr.rel (0) target = $region37
    $region36: #{tpu_custom_call.1} parent=1 // pred_region
      _
    $region37: #{tpu_custom_call.1} parent=1 // pred_fallthru
      _
    // Predicated region
    $region38: #{tpu_custom_call.1} parent=1 // pred_check
      _
    $region39: #{tpu_custom_call.1} parent=1 // pred_check_branch
      %64 = sbr.rel (0) target = $region41
    $region40: #{tpu_custom_call.1} parent=1 // pred_region
      _
    $region41: #{tpu_custom_call.1} parent=1 // pred_fallthru
      _
    // Predicated region
    $region42: #{tpu_custom_call.1} parent=1 // pred_check
      _
    $region43: #{tpu_custom_call.1} parent=1 // pred_check_branch
      %66 = sbr.rel (0) target = $region45
    $region44: #{tpu_custom_call.1} parent=1 // pred_region
      %67 = dma.done [#allocation7], 256
    $region45: #{tpu_custom_call.1} parent=1 // pred_fallthru
      _
    // Predicated region
    $region46: #{tpu_custom_call.1} parent=1 // pred_check
      _
    $region47: #{tpu_custom_call.1} parent=1 // pred_check_branch
      %69 = sbr.rel (0) target = $region49
    $region48: #{tpu_custom_call.1} parent=1 // pred_region
      %70 = dma.done [#allocation9], 16
    $region49: #{tpu_custom_call.1} parent=1 // pred_fallthru
      _
    // Predicated region
    $region50: #{tpu_custom_call.1} parent=1 // pred_check
      _
    $region51: #{tpu_custom_call.1} parent=1 // pred_check_branch
      %72 = sbr.rel (0) target = $region53
    $region52: #{tpu_custom_call.1} parent=1 // pred_region
      %73 = dma.done [#allocation9], 2048
    $region53: #{tpu_custom_call.1} parent=1 // pred_fallthru
      _
    %v74 = vld [vmem:[%s0] sm:$0xff]
    %v75 = vld [vmem:[%s0 + $0x8] sm:$0xff]
    %v76 = vld [vmem:[#allocation6] sm:$0xff]
    %v77 = vld [vmem:[#allocation6 + $0x8] sm:$0xff]
    %v78 = vld [vmem:[#allocation8] sm:$0x1]
    %v80 = vlaneseq
    %v81 = vshrl.u32 %v80, 7
    %v82 = vsub.s32 0, %v81
    %v83 = vrot.slane %v78, %v82
    %vm85 = vcmask 130048
    %v87 = vsel %vm85, %v74, 0
    %v90 = vsel %vm85, %v75, 0
    %92 = vmatprep.subr.mxu0 0.0
    %93 = vmatpush1.msra.mxu0 %v76
    %94 = vmatprep.subr.mxu0 0.0
    %95 = vmatpush1.msra.mxu0 %v77
    %96 = vmatprep.subr.mxu0 0.0
    %97 = vmatpush1.msra.mxu0 0.0
    %98 = vmatprep.subr.mxu0 0.0
    %99 = vmatpush1.msra.mxu0 0.0
    %100 = vmatprep.subr.mxu0 0.0
    %101 = vmatpush1.msra.mxu0 0.0
    %102 = vmatprep.subr.mxu0 0.0
    %103 = vmatpush1.msra.mxu0 0.0
    %104 = vmatprep.subr.mxu0 0.0
    %105 = vmatpush1.msra.mxu0 0.0
    %106 = vmatprep.subr.mxu0 0.0
    %107 = vmatpush1.msra.mxu0 0.0
    %108 = vmatprep.subr.mxu0 0.0
    %109 = vmatpush1.msra.mxu0 0.0
    %110 = vmatprep.subr.mxu0 0.0
    %111 = vmatpush1.msra.mxu0 0.0
    %112 = vmatprep.subr.mxu0 0.0
    %113 = vmatpush1.msra.mxu0 0.0
    %114 = vmatprep.subr.mxu0 0.0
    %115 = vmatpush1.msra.mxu0 0.0
    %116 = vmatprep.subr.mxu0 0.0
    %117 = vmatpush1.msra.mxu0 0.0
    %118 = vmatprep.subr.mxu0 0.0
    %119 = vmatpush1.msra.mxu0 0.0
    %120 = vmatprep.subr.mxu0 0.0
    %121 = vmatpush1.msra.mxu0 0.0
    %122 = vmatprep.subr.mxu0 0.0
    %123 = vmatpush1.msra.mxu0 0.0
    %124 = vmatprep.subr.mxu0 0.0
    %125 = vmatpush1.msra.mxu0 0.0
    %126 = vmatprep.subr.mxu0 0.0
    %127 = vmatpush1.msra.mxu0 0.0
    %128 = vmatprep.subr.mxu0 0.0
    %129 = vmatpush1.msra.mxu0 0.0
    %130 = vmatprep.subr.mxu0 0.0
    %131 = vmatpush1.msra.mxu0 0.0
    %132 = vmatprep.subr.mxu0 0.0
    %133 = vmatpush1.msra.mxu0 0.0
    %134 = vmatprep.subr.mxu0 0.0
    %135 = vmatpush1.msra.mxu0 0.0
    %136 = vmatprep.subr.mxu0 0.0
    %137 = vmatpush1.msra.mxu0 0.0
    %138 = vmatprep.subr.mxu0 0.0
    %139 = vmatpush1.msra.mxu0 0.0
    %140 = vmatprep.subr.mxu0 0.0
    %141 = vmatpush1.msra.mxu0 0.0
    %142 = vmatprep.subr.mxu0 0.0
    %143 = vmatpush1.msra.mxu0 0.0
    %144 = vmatprep.subr.mxu0 0.0
    %145 = vmatpush1.msra.mxu0 0.0
    %146 = vmatprep.subr.mxu0 0.0
    %147 = vmatpush1.msra.mxu0 0.0
    %148 = vmatprep.subr.mxu0 0.0
    %149 = vmatpush1.msra.mxu0 0.0
    %150 = vmatprep.subr.mxu0 0.0
    %151 = vmatpush1.msra.mxu0 0.0
    %152 = vmatprep.subr.mxu0 0.0
    %153 = vmatpush1.msra.mxu0 0.0
    %154 = vmatprep.subr.mxu0 0.0
    %155 = vmatpush1.msra.mxu0 0.0
    %156 = vmatprep.mubr.f32.mxu0 0.0
    %157 = vmatmul.mubr.f32.gmra.mrb[0].mxu0 %v87
    %v158 = vpop.f32.mrb[0].mxu0
    %v159 = vadd.f32 %v83, %v158
    %v160 = vpop.f32.mrb[0].mxu0
    %161 = vmatprep.mubr.f32.mxu0 0.0
    %162 = vmatmul.mubr.f32.gmra.mrb[0].mxu0 %v90
    %v163 = vpop.f32.mrb[0].mxu0
    %v164 = vadd.f32 %v83, %v163
    %v165 = vpop.f32.mrb[0].mxu0
    %166 = vdwg.mxu0
    %v167 = vmax.f32 %v159, 0.0
    %v168 = vmax.f32 %v164, 0.0
    %v169 = vld [vmem:[#allocation10] sm:$0xff]
    %v170 = vld [vmem:[#allocation10 + $0x8] sm:$0xff]
    %v171 = vld [vmem:[#allocation10 + $0x10] sm:$0xff]
    %v172 = vld [vmem:[#allocation10 + $0x18] sm:$0xff]
    %v173 = vld [vmem:[#allocation10 + $0x20] sm:$0xff]
    %v174 = vld [vmem:[#allocation10 + $0x28] sm:$0xff]
    %v175 = vld [vmem:[#allocation10 + $0x30] sm:$0xff]
    %v176 = vld [vmem:[#allocation10 + $0x38] sm:$0xff]
    %v177 = vld [vmem:[#allocation10 + $0x40] sm:$0xff]
    %v178 = vld [vmem:[#allocation10 + $0x48] sm:$0xff]
    %v179 = vld [vmem:[#allocation10 + $0x50] sm:$0xff]
    %v180 = vld [vmem:[#allocation10 + $0x58] sm:$0xff]
    %v181 = vld [vmem:[#allocation10 + $0x60] sm:$0xff]
    %v182 = vld [vmem:[#allocation10 + $0x68] sm:$0xff]
    %v183 = vld [vmem:[#allocation10 + $0x70] sm:$0xff]
    %v184 = vld [vmem:[#allocation10 + $0x78] sm:$0xff]
    %v185 = vld [vmem:[%s4] sm:$0x3]
    %v187 = vlaneseq
    %v188 = vshrl.u32 %v187, 7
    %v189 = vsub.s32 0, %v188
    %v190 = vrot.slane %v185, %v189
    %v191 = vlaneseq
    %v192 = vshrl.u32 %v191, 7
    %v193 = vsub.s32 1, %v192
    %v194 = vrot.slane %v185, %v193
    %vm197 = vcmask 523264
    %v199 = vsel %vm197, %v167, 0
    %v202 = vsel %vm197, %v168, 0
    %204 = vmatprep.subr.mxu0 %v170
    %205 = vmatpush1.msra.mxu0 %v169
    %206 = vmatprep.subr.mxu0 %v172
    %207 = vmatpush1.msra.mxu0 %v171
    %208 = vmatprep.subr.mxu0 %v174
    %209 = vmatpush1.msra.mxu0 %v173
    %210 = vmatprep.subr.mxu0 %v176
    %211 = vmatpush1.msra.mxu0 %v175
    %212 = vmatprep.subr.mxu0 %v178
    %213 = vmatpush1.msra.mxu0 %v177
    %214 = vmatprep.subr.mxu0 %v180
    %215 = vmatpush1.msra.mxu0 %v179
    %216 = vmatprep.subr.mxu0 %v182
    %217 = vmatpush1.msra.mxu0 %v181
    %218 = vmatprep.subr.mxu0 %v184
    %219 = vmatpush1.msra.mxu0 %v183
    %220 = vmatprep.subr.mxu0 0.0
    %221 = vmatpush1.msra.mxu0 0.0
    %222 = vmatprep.subr.mxu0 0.0
    %223 = vmatpush1.msra.mxu0 0.0
    %224 = vmatprep.subr.mxu0 0.0
    %225 = vmatpush1.msra.mxu0 0.0
    %226 = vmatprep.subr.mxu0 0.0
    %227 = vmatpush1.msra.mxu0 0.0
    %228 = vmatprep.subr.mxu0 0.0
    %229 = vmatpush1.msra.mxu0 0.0
    %230 = vmatprep.subr.mxu0 0.0
    %231 = vmatpush1.msra.mxu0 0.0
    %232 = vmatprep.subr.mxu0 0.0
    %233 = vmatpush1.msra.mxu0 0.0
    %234 = vmatprep.subr.mxu0 0.0
    %235 = vmatpush1.msra.mxu0 0.0
    %236 = vmatprep.subr.mxu0 0.0
    %237 = vmatpush1.msra.mxu0 0.0
    %238 = vmatprep.subr.mxu0 0.0
    %239 = vmatpush1.msra.mxu0 0.0
    %240 = vmatprep.subr.mxu0 0.0
    %241 = vmatpush1.msra.mxu0 0.0
    %242 = vmatprep.subr.mxu0 0.0
    %243 = vmatpush1.msra.mxu0 0.0
    %244 = vmatprep.subr.mxu0 0.0
    %245 = vmatpush1.msra.mxu0 0.0
    %246 = vmatprep.subr.mxu0 0.0
    %247 = vmatpush1.msra.mxu0 0.0
    %248 = vmatprep.subr.mxu0 0.0
    %249 = vmatpush1.msra.mxu0 0.0
    %250 = vmatprep.subr.mxu0 0.0
    %251 = vmatpush1.msra.mxu0 0.0
    %252 = vmatprep.subr.mxu0 0.0
    %253 = vmatpush1.msra.mxu0 0.0
    %254 = vmatprep.subr.mxu0 0.0
    %255 = vmatpush1.msra.mxu0 0.0
    %256 = vmatprep.subr.mxu0 0.0
    %257 = vmatpush1.msra.mxu0 0.0
    %258 = vmatprep.subr.mxu0 0.0
    %259 = vmatpush1.msra.mxu0 0.0
    %260 = vmatprep.subr.mxu0 0.0
    %261 = vmatpush1.msra.mxu0 0.0
    %262 = vmatprep.subr.mxu0 0.0
    %263 = vmatpush1.msra.mxu0 0.0
    %264 = vmatprep.subr.mxu0 0.0
    %265 = vmatpush1.msra.mxu0 0.0
    %266 = vmatprep.subr.mxu0 0.0
    %267 = vmatpush1.msra.mxu0 0.0
    %268 = vmatprep.mubr.f32.mxu0 0.0
    %269 = vmatmul.mubr.f32.gmra.mrb[0].mxu0 %v199
    %v270 = vpop.f32.mrb[0].mxu0
    %v271 = vadd.f32 %v190, %v270
    %v272 = vpop.f32.mrb[0].mxu0
    %v273 = vadd.f32 %v194, %v272
    %274 = vmatprep.mubr.f32.mxu0 0.0
    %275 = vmatmul.mubr.f32.gmra.mrb[0].mxu0 %v202
    %v276 = vpop.f32.mrb[0].mxu0
    %v277 = vadd.f32 %v190, %v276
    %v278 = vpop.f32.mrb[0].mxu0
    %v279 = vadd.f32 %v194, %v278
    %280 = vdwg.mxu0
    %281 = vst [vmem:[#allocation2] sm:$0xff] %v271
    %282 = vst [vmem:[#allocation2 + $0x8] sm:$0xff] %v277
    %283 = vst [vmem:[#allocation3] sm:$0xff] %v273
    %284 = vst [vmem:[#allocation3 + $0x8] sm:$0xff] %v279
    %v285 = vld [vmem:[%s5] sm:$0xff]
    %v286 = vld [vmem:[%s5 + $0x8] sm:$0xff]
    %v287 = vld [vmem:[%s5 + $0x10] sm:$0xff]
    %v288 = vld [vmem:[%s5 + $0x18] sm:$0xff]
    %v289 = vld [vmem:[%s6] sm:$0xff]
    %v290 = vld [vmem:[%s6 + $0x8] sm:$0xff]
    %v291 = vld [vmem:[%s6 + $0x10] sm:$0xff]
    %v292 = vld [vmem:[%s6 + $0x18] sm:$0xff]
    %v293 = vld [vmem:[#allocation2] sm:$0x3]
    %vm294 = vcmask 261120
    %v296 = vsel %vm294, 0.0, 0
    %298 = vmatprep.subr.mxu0 0.0
    %299 = vmatpush1.msra.mxu0 %v285
    %300 = vmatprep.subr.mxu0 0.0
    %301 = vmatpush1.msra.mxu0 %v286
    %302 = vmatprep.subr.mxu0 0.0
    %303 = vmatpush1.msra.mxu0 %v287
    %304 = vmatprep.subr.mxu0 0.0
    %305 = vmatpush1.msra.mxu0 %v288
    %306 = vmatprep.subr.mxu0 0.0
    %307 = vmatpush1.msra.mxu0 0.0
    %308 = vmatprep.subr.mxu0 0.0
    %309 = vmatpush1.msra.mxu0 0.0
    %310 = vmatprep.subr.mxu0 0.0
    %311 = vmatpush1.msra.mxu0 0.0
    %312 = vmatprep.subr.mxu0 0.0
    %313 = vmatpush1.msra.mxu0 0.0
    %314 = vmatprep.subr.mxu0 0.0
    %315 = vmatpush1.msra.mxu0 0.0
    %316 = vmatprep.subr.mxu0 0.0
    %317 = vmatpush1.msra.mxu0 0.0
    %318 = vmatprep.subr.mxu0 0.0
    %319 = vmatpush1.msra.mxu0 0.0
    %320 = vmatprep.subr.mxu0 0.0
    %321 = vmatpush1.msra.mxu0 0.0
    %322 = vmatprep.subr.mxu0 0.0
    %323 = vmatpush1.msra.mxu0 0.0
    %324 = vmatprep.subr.mxu0 0.0
    %325 = vmatpush1.msra.mxu0 0.0
    %326 = vmatprep.subr.mxu0 0.0
    %327 = vmatpush1.msra.mxu0 0.0
    %328 = vmatprep.subr.mxu0 0.0
    %329 = vmatpush1.msra.mxu0 0.0
    %330 = vmatprep.subr.mxu0 0.0
    %331 = vmatpush1.msra.mxu0 0.0
    %332 = vmatprep.subr.mxu0 0.0
    %333 = vmatpush1.msra.mxu0 0.0
    %334 = vmatprep.subr.mxu0 0.0
    %335 = vmatpush1.msra.mxu0 0.0
    %336 = vmatprep.subr.mxu0 0.0
    %337 = vmatpush1.msra.mxu0 0.0
    %338 = vmatprep.subr.mxu0 0.0
    %339 = vmatpush1.msra.mxu0 0.0
    %340 = vmatprep.subr.mxu0 0.0
    %341 = vmatpush1.msra.mxu0 0.0
    %342 = vmatprep.subr.mxu0 0.0
    %343 = vmatpush1.msra.mxu0 0.0
    %344 = vmatprep.subr.mxu0 0.0
    %345 = vmatpush1.msra.mxu0 0.0
    %346 = vmatprep.subr.mxu0 0.0
    %347 = vmatpush1.msra.mxu0 0.0
    %348 = vmatprep.subr.mxu0 0.0
    %349 = vmatpush1.msra.mxu0 0.0
    %350 = vmatprep.subr.mxu0 0.0
    %351 = vmatpush1.msra.mxu0 0.0
    %352 = vmatprep.subr.mxu0 0.0
    %353 = vmatpush1.msra.mxu0 0.0
    %354 = vmatprep.subr.mxu0 0.0
    %355 = vmatpush1.msra.mxu0 0.0
    %356 = vmatprep.subr.mxu0 0.0
    %357 = vmatpush1.msra.mxu0 0.0
    %358 = vmatprep.subr.mxu0 0.0
    %359 = vmatpush1.msra.mxu0 0.0
    %360 = vmatprep.subr.mxu0 0.0
    %361 = vmatpush1.msra.mxu0 0.0
    %362 = vmatprep.mubr.f32.mxu0 0.0
    %363 = vmatmul.mubr.f32.gmra.mrb[0].mxu0 %v296
    %v364 = vpop.f32.mrb[0].mxu0
    %v365 = vadd.f32 0.0, %v364
    %v366 = vpop.f32.mrb[0].mxu0
    %367 = vdwg.mxu0
    %v368 = vadd.f32 %v293, %v365
    %v369 = vld [vmem:[#allocation3 + $0xe] sm:$0x3]
    %370 = vmatprep.subr.mxu0 0.0
    %371 = vmatpush1.msra.mxu0 %v289
    %372 = vmatprep.subr.mxu0 0.0
    %373 = vmatpush1.msra.mxu0 %v290
    %374 = vmatprep.subr.mxu0 0.0
    %375 = vmatpush1.msra.mxu0 %v291
    %376 = vmatprep.subr.mxu0 0.0
    %377 = vmatpush1.msra.mxu0 %v292
    %378 = vmatprep.subr.mxu0 0.0
    %379 = vmatpush1.msra.mxu0 0.0
    %380 = vmatprep.subr.mxu0 0.0
    %381 = vmatpush1.msra.mxu0 0.0
    %382 = vmatprep.subr.mxu0 0.0
    %383 = vmatpush1.msra.mxu0 0.0
    %384 = vmatprep.subr.mxu0 0.0
    %385 = vmatpush1.msra.mxu0 0.0
    %386 = vmatprep.subr.mxu0 0.0
    %387 = vmatpush1.msra.mxu0 0.0
    %388 = vmatprep.subr.mxu0 0.0
    %389 = vmatpush1.msra.mxu0 0.0
    %390 = vmatprep.subr.mxu0 0.0
    %391 = vmatpush1.msra.mxu0 0.0
    %392 = vmatprep.subr.mxu0 0.0
    %393 = vmatpush1.msra.mxu0 0.0
    %394 = vmatprep.subr.mxu0 0.0
    %395 = vmatpush1.msra.mxu0 0.0
    %396 = vmatprep.subr.mxu0 0.0
    %397 = vmatpush1.msra.mxu0 0.0
    %398 = vmatprep.subr.mxu0 0.0
    %399 = vmatpush1.msra.mxu0 0.0
    %400 = vmatprep.subr.mxu0 0.0
    %401 = vmatpush1.msra.mxu0 0.0
    %402 = vmatprep.subr.mxu0 0.0
    %403 = vmatpush1.msra.mxu0 0.0
    %404 = vmatprep.subr.mxu0 0.0
    %405 = vmatpush1.msra.mxu0 0.0
    %406 = vmatprep.subr.mxu0 0.0
    %407 = vmatpush1.msra.mxu0 0.0
    %408 = vmatprep.subr.mxu0 0.0
    %409 = vmatpush1.msra.mxu0 0.0
    %410 = vmatprep.subr.mxu0 0.0
    %411 = vmatpush1.msra.mxu0 0.0
    %412 = vmatprep.subr.mxu0 0.0
    %413 = vmatpush1.msra.mxu0 0.0
    %414 = vmatprep.subr.mxu0 0.0
    %415 = vmatpush1.msra.mxu0 0.0
    %416 = vmatprep.subr.mxu0 0.0
    %417 = vmatpush1.msra.mxu0 0.0
    %418 = vmatprep.subr.mxu0 0.0
    %419 = vmatpush1.msra.mxu0 0.0
    %420 = vmatprep.subr.mxu0 0.0
    %421 = vmatpush1.msra.mxu0 0.0
    %422 = vmatprep.subr.mxu0 0.0
    %423 = vmatpush1.msra.mxu0 0.0
    %424 = vmatprep.subr.mxu0 0.0
    %425 = vmatpush1.msra.mxu0 0.0
    %426 = vmatprep.subr.mxu0 0.0
    %427 = vmatpush1.msra.mxu0 0.0
    %428 = vmatprep.subr.mxu0 0.0
    %429 = vmatpush1.msra.mxu0 0.0
    %430 = vmatprep.subr.mxu0 0.0
    %431 = vmatpush1.msra.mxu0 0.0
    %432 = vmatprep.subr.mxu0 0.0
    %433 = vmatpush1.msra.mxu0 0.0
    %434 = vmatprep.mubr.f32.mxu0 0.0
    %435 = vmatmul.mubr.f32.gmra.mrb[0].mxu0 %v296
    %v436 = vpop.f32.mrb[0].mxu0
    %v437 = vadd.f32 0.0, %v436
    %v438 = vpop.f32.mrb[0].mxu0
    %439 = vdwg.mxu0
    %v440 = vadd.f32 %v369, %v437
    %v441 = vxor.u32 %v368, 2147483648
    %v442 = vmul.f32 %v441, 1.442695
    %v443 = vpow.pop %v442
    %v444 = vadd.f32 %v443, 1.0
    %v445 = vrcp.pop %v444
    %v446 = vmul.f32 1.0, %v445
    %v447 = vtanh.pop %v368
    %v448 = vmul.f32 %v446, 0.0
    %450 = vrot.lane.b32.xlu0 %v447, 32
    %v451 = vpop.permute.xlu0 %450
    %v453 = vmul.f32 %v446, %v451
    %455 = vrot.lane.b32.xlu0 %v453, 32
    %v456 = vpop.permute.xlu0 %455
    %v458 = vadd.f32 %v448, %v456
    %v459 = vtanh.pop %v458
    %461 = vrot.lane.b32.xlu0 %v459, 32
    %v462 = vpop.permute.xlu0 %461
    %v464 = vmul.f32 %v446, %v462
    %v465 = vxor.u32 %v440, 2147483648
    %v466 = vmul.f32 %v465, 1.442695
    %v467 = vpow.pop %v466
    %v468 = vadd.f32 %v467, 1.0
    %v469 = vrcp.pop %v468
    %v470 = vmul.f32 1.0, %v469
    %v471 = vtanh.pop %v440
    %v472 = vmul.f32 %v470, 0.0
    %474 = vrot.lane.b32.xlu0 %v471, 32
    %v475 = vpop.permute.xlu0 %474
    %v477 = vmul.f32 %v470, %v475
    %479 = vrot.lane.b32.xlu0 %v477, 32
    %v480 = vpop.permute.xlu0 %479
    %v482 = vadd.f32 %v472, %v480
    %v483 = vtanh.pop %v482
    %485 = vrot.lane.b32.xlu0 %v483, 32
    %v486 = vpop.permute.xlu0 %485
    %v488 = vmul.f32 %v470, %v486
    %490 = vrot.lane.b32.xlu0 %v464, 64
    %v491 = vpop.permute.xlu0 %490
    %vm493 = vcmask 254976
    %494 = vst.msk [vmem:[#allocation4] sm:$0x3] %vm493, %v491
    %496 = vrot.lane.b32.xlu0 %v488, 64
    %v497 = vpop.permute.xlu0 %496
    %499 = vst.msk [vmem:[#allocation5 + $0xe] sm:$0x3] %vm493, %v497
    %v500 = vld [vmem:[#allocation2 + $0x2] sm:$0x3]
    %v501 = vsel %vm294, %v491, 0
    %503 = vmatprep.subr.mxu0 0.0
    %504 = vmatpush1.msra.mxu0 %v285
    %505 = vmatprep.subr.mxu0 0.0
    %506 = vmatpush1.msra.mxu0 %v286
    %507 = vmatprep.subr.mxu0 0.0
    %508 = vmatpush1.msra.mxu0 %v287
    %509 = vmatprep.subr.mxu0 0.0
    %510 = vmatpush1.msra.mxu0 %v288
    %511 = vmatprep.subr.mxu0 0.0
    %512 = vmatpush1.msra.mxu0 0.0
    %513 = vmatprep.subr.mxu0 0.0
    %514 = vmatpush1.msra.mxu0 0.0
    %515 = vmatprep.subr.mxu0 0.0
    %516 = vmatpush1.msra.mxu0 0.0
    %517 = vmatprep.subr.mxu0 0.0
    %518 = vmatpush1.msra.mxu0 0.0
    %519 = vmatprep.subr.mxu0 0.0
    %520 = vmatpush1.msra.mxu0 0.0
    %521 = vmatprep.subr.mxu0 0.0
    %522 = vmatpush1.msra.mxu0 0.0
    %523 = vmatprep.subr.mxu0 0.0
    %524 = vmatpush1.msra.mxu0 0.0
    %525 = vmatprep.subr.mxu0 0.0
    %526 = vmatpush1.msra.mxu0 0.0
    %527 = vmatprep.subr.mxu0 0.0
    %528 = vmatpush1.msra.mxu0 0.0
    %529 = vmatprep.subr.mxu0 0.0
    %530 = vmatpush1.msra.mxu0 0.0
    %531 = vmatprep.subr.mxu0 0.0
    %532 = vmatpush1.msra.mxu0 0.0
    %533 = vmatprep.subr.mxu0 0.0
    %534 = vmatpush1.msra.mxu0 0.0
    %535 = vmatprep.subr.mxu0 0.0
    %536 = vmatpush1.msra.mxu0 0.0
    %537 = vmatprep.subr.mxu0 0.0
    %538 = vmatpush1.msra.mxu0 0.0
    %539 = vmatprep.subr.mxu0 0.0
    %540 = vmatpush1.msra.mxu0 0.0
    %541 = vmatprep.subr.mxu0 0.0
    %542 = vmatpush1.msra.mxu0 0.0
    %543 = vmatprep.subr.mxu0 0.0
    %544 = vmatpush1.msra.mxu0 0.0
    %545 = vmatprep.subr.mxu0 0.0
    %546 = vmatpush1.msra.mxu0 0.0
    %547 = vmatprep.subr.mxu0 0.0
    %548 = vmatpush1.msra.mxu0 0.0
    %549 = vmatprep.subr.mxu0 0.0
    %550 = vmatpush1.msra.mxu0 0.0
    %551 = vmatprep.subr.mxu0 0.0
    %552 = vmatpush1.msra.mxu0 0.0
    %553 = vmatprep.subr.mxu0 0.0
    %554 = vmatpush1.msra.mxu0 0.0
    %555 = vmatprep.subr.mxu0 0.0
    %556 = vmatpush1.msra.mxu0 0.0
    %557 = vmatprep.subr.mxu0 0.0
    %558 = vmatpush1.msra.mxu0 0.0
    %559 = vmatprep.subr.mxu0 0.0
    %560 = vmatpush1.msra.mxu0 0.0
    %561 = vmatprep.subr.mxu0 0.0
    %562 = vmatpush1.msra.mxu0 0.0
    %563 = vmatprep.subr.mxu0 0.0
    %564 = vmatpush1.msra.mxu0 0.0
    %565 = vmatprep.subr.mxu0 0.0
    %566 = vmatpush1.msra.mxu0 0.0
    %567 = vmatprep.mubr.f32.mxu0 0.0
    %568 = vmatmul.mubr.f32.gmra.mrb[0].mxu0 %v501
    %v569 = vpop.f32.mrb[0].mxu0
    %v570 = vadd.f32 0.0, %v569
    %v571 = vpop.f32.mrb[0].mxu0
    %572 = vdwg.mxu0
    %v573 = vadd.f32 %v500, %v570
    %v574 = vld [vmem:[#allocation3 + $0xc] sm:$0x3]
    %v575 = vsel %vm294, %v497, 0
    %577 = vmatprep.subr.mxu0 0.0
    %578 = vmatpush1.msra.mxu0 %v289
    %579 = vmatprep.subr.mxu0 0.0
    %580 = vmatpush1.msra.mxu0 %v290
    %581 = vmatprep.subr.mxu0 0.0
    %582 = vmatpush1.msra.mxu0 %v291
    %583 = vmatprep.subr.mxu0 0.0
    %584 = vmatpush1.msra.mxu0 %v292
    %585 = vmatprep.subr.mxu0 0.0
    %586 = vmatpush1.msra.mxu0 0.0
    %587 = vmatprep.subr.mxu0 0.0
    %588 = vmatpush1.msra.mxu0 0.0
    %589 = vmatprep.subr.mxu0 0.0
    %590 = vmatpush1.msra.mxu0 0.0
    %591 = vmatprep.subr.mxu0 0.0
    %592 = vmatpush1.msra.mxu0 0.0
    %593 = vmatprep.subr.mxu0 0.0
    %594 = vmatpush1.msra.mxu0 0.0
    %595 = vmatprep.subr.mxu0 0.0
    %596 = vmatpush1.msra.mxu0 0.0
    %597 = vmatprep.subr.mxu0 0.0
    %598 = vmatpush1.msra.mxu0 0.0
    %599 = vmatprep.subr.mxu0 0.0
    %600 = vmatpush1.msra.mxu0 0.0
    %601 = vmatprep.subr.mxu0 0.0
    %602 = vmatpush1.msra.mxu0 0.0
    %603 = vmatprep.subr.mxu0 0.0
    %604 = vmatpush1.msra.mxu0 0.0
    %605 = vmatprep.subr.mxu0 0.0
    %606 = vmatpush1.msra.mxu0 0.0
    %607 = vmatprep.subr.mxu0 0.0
    %608 = vmatpush1.msra.mxu0 0.0
    %609 = vmatprep.subr.mxu0 0.0
    %610 = vmatpush1.msra.mxu0 0.0
    %611 = vmatprep.subr.mxu0 0.0
    %612 = vmatpush1.msra.mxu0 0.0
    %613 = vmatprep.subr.mxu0 0.0
    %614 = vmatpush1.msra.mxu0 0.0
    %615 = vmatprep.subr.mxu0 0.0
    %616 = vmatpush1.msra.mxu0 0.0
    %617 = vmatprep.subr.mxu0 0.0
    %618 = vmatpush1.msra.mxu0 0.0
    %619 = vmatprep.subr.mxu0 0.0
    %620 = vmatpush1.msra.mxu0 0.0
    %621 = vmatprep.subr.mxu0 0.0
    %622 = vmatpush1.msra.mxu0 0.0
    %623 = vmatprep.subr.mxu0 0.0
    %624 = vmatpush1.msra.mxu0 0.0
    %625 = vmatprep.subr.mxu0 0.0
    %626 = vmatpush1.msra.mxu0 0.0
    %627 = vmatprep.subr.mxu0 0.0
    %628 = vmatpush1.msra.mxu0 0.0
    %629 = vmatprep.subr.mxu0 0.0
    %630 = vmatpush1.msra.mxu0 0.0
    %631 = vmatprep.subr.mxu0 0.0
    %632 = vmatpush1.msra.mxu0 0.0
    %633 = vmatprep.subr.mxu0 0.0
    %634 = vmatpush1.msra.mxu0 0.0
    %635 = vmatprep.subr.mxu0 0.0
    %636 = vmatpush1.msra.mxu0 0.0
    %637 = vmatprep.subr.mxu0 0.0
    %638 = vmatpush1.msra.mxu0 0.0
    %639 = vmatprep.subr.mxu0 0.0
    %640 = vmatpush1.msra.mxu0 0.0
    %641 = vmatprep.mubr.f32.mxu0 0.0
    %642 = vmatmul.mubr.f32.gmra.mrb[0].mxu0 %v575
    %v643 = vpop.f32.mrb[0].mxu0
    %v644 = vadd.f32 0.0, %v643
    %v645 = vpop.f32.mrb[0].mxu0
    %646 = vdwg.mxu0
    %v647 = vadd.f32 %v574, %v644
    %v648 = vxor.u32 %v573, 2147483648
    %v649 = vmul.f32 %v648, 1.442695
    %v650 = vpow.pop %v649
    %v651 = vadd.f32 %v650, 1.0
    %v652 = vrcp.pop %v651
    %v653 = vmul.f32 1.0, %v652
    %v654 = vtanh.pop %v573
    %v655 = vmul.f32 %v653, %v458
    %657 = vrot.lane.b32.xlu0 %v654, 32
    %v658 = vpop.permute.xlu0 %657
    %v660 = vmul.f32 %v653, %v658
    %662 = vrot.lane.b32.xlu0 %v660, 32
    %v663 = vpop.permute.xlu0 %662
    %v665 = vadd.f32 %v655, %v663
    %v666 = vtanh.pop %v665
    %668 = vrot.lane.b32.xlu0 %v666, 32
    %v669 = vpop.permute.xlu0 %668
    %v671 = vmul.f32 %v653, %v669
    %v672 = vxor.u32 %v647, 2147483648
    %v673 = vmul.f32 %v672, 1.442695
    %v674 = vpow.pop %v673
    %v675 = vadd.f32 %v674, 1.0
    %v676 = vrcp.pop %v675
    %v677 = vmul.f32 1.0, %v676
    %v678 = vtanh.pop %v647
    %v679 = vmul.f32 %v677, %v482
    %681 = vrot.lane.b32.xlu0 %v678, 32
    %v682 = vpop.permute.xlu0 %681
    %v684 = vmul.f32 %v677, %v682
    %686 = vrot.lane.b32.xlu0 %v684, 32
    %v687 = vpop.permute.xlu0 %686
    %v689 = vadd.f32 %v679, %v687
    %v690 = vtanh.pop %v689
    %692 = vrot.lane.b32.xlu0 %v690, 32
    %v693 = vpop.permute.xlu0 %692
    %v695 = vmul.f32 %v677, %v693
    %697 = vrot.lane.b32.xlu0 %v671, 64
    %v698 = vpop.permute.xlu0 %697
    %700 = vst.msk [vmem:[#allocation4 + $0x2] sm:$0x3] %vm493, %v698
    %702 = vrot.lane.b32.xlu0 %v695, 64
    %v703 = vpop.permute.xlu0 %702
    %705 = vst.msk [vmem:[#allocation5 + $0xc] sm:$0x3] %vm493, %v703
    %v706 = vld [vmem:[#allocation2 + $0x4] sm:$0x3]
    %v707 = vsel %vm294, %v698, 0
    %709 = vmatprep.subr.mxu0 0.0
    %710 = vmatpush1.msra.mxu0 %v285
    %711 = vmatprep.subr.mxu0 0.0
    %712 = vmatpush1.msra.mxu0 %v286
    %713 = vmatprep.subr.mxu0 0.0
    %714 = vmatpush1.msra.mxu0 %v287
    %715 = vmatprep.subr.mxu0 0.0
    %716 = vmatpush1.msra.mxu0 %v288
    %717 = vmatprep.subr.mxu0 0.0
    %718 = vmatpush1.msra.mxu0 0.0
    %719 = vmatprep.subr.mxu0 0.0
    %720 = vmatpush1.msra.mxu0 0.0
    %721 = vmatprep.subr.mxu0 0.0
    %722 = vmatpush1.msra.mxu0 0.0
    %723 = vmatprep.subr.mxu0 0.0
    %724 = vmatpush1.msra.mxu0 0.0
    %725 = vmatprep.subr.mxu0 0.0
    %726 = vmatpush1.msra.mxu0 0.0
    %727 = vmatprep.subr.mxu0 0.0
    %728 = vmatpush1.msra.mxu0 0.0
    %729 = vmatprep.subr.mxu0 0.0
    %730 = vmatpush1.msra.mxu0 0.0
    %731 = vmatprep.subr.mxu0 0.0
    %732 = vmatpush1.msra.mxu0 0.0
    %733 = vmatprep.subr.mxu0 0.0
    %734 = vmatpush1.msra.mxu0 0.0
    %735 = vmatprep.subr.mxu0 0.0
    %736 = vmatpush1.msra.mxu0 0.0
    %737 = vmatprep.subr.mxu0 0.0
    %738 = vmatpush1.msra.mxu0 0.0
    %739 = vmatprep.subr.mxu0 0.0
    %740 = vmatpush1.msra.mxu0 0.0
    %741 = vmatprep.subr.mxu0 0.0
    %742 = vmatpush1.msra.mxu0 0.0
    %743 = vmatprep.subr.mxu0 0.0
    %744 = vmatpush1.msra.mxu0 0.0
    %745 = vmatprep.subr.mxu0 0.0
    %746 = vmatpush1.msra.mxu0 0.0
    %747 = vmatprep.subr.mxu0 0.0
    %748 = vmatpush1.msra.mxu0 0.0
    %749 = vmatprep.subr.mxu0 0.0
    %750 = vmatpush1.msra.mxu0 0.0
    %751 = vmatprep.subr.mxu0 0.0
    %752 = vmatpush1.msra.mxu0 0.0
    %753 = vmatprep.subr.mxu0 0.0
    %754 = vmatpush1.msra.mxu0 0.0
    %755 = vmatprep.subr.mxu0 0.0
    %756 = vmatpush1.msra.mxu0 0.0
    %757 = vmatprep.subr.mxu0 0.0
    %758 = vmatpush1.msra.mxu0 0.0
    %759 = vmatprep.subr.mxu0 0.0
    %760 = vmatpush1.msra.mxu0 0.0
    %761 = vmatprep.subr.mxu0 0.0
    %762 = vmatpush1.msra.mxu0 0.0
    %763 = vmatprep.subr.mxu0 0.0
    %764 = vmatpush1.msra.mxu0 0.0
    %765 = vmatprep.subr.mxu0 0.0
    %766 = vmatpush1.msra.mxu0 0.0
    %767 = vmatprep.subr.mxu0 0.0
    %768 = vmatpush1.msra.mxu0 0.0
    %769 = vmatprep.subr.mxu0 0.0
    %770 = vmatpush1.msra.mxu0 0.0
    %771 = vmatprep.subr.mxu0 0.0
    %772 = vmatpush1.msra.mxu0 0.0
    %773 = vmatprep.mubr.f32.mxu0 0.0
    %774 = vmatmul.mubr.f32.gmra.mrb[0].mxu0 %v707
    %v775 = vpop.f32.mrb[0].mxu0
    %v776 = vadd.f32 0.0, %v775
    %v777 = vpop.f32.mrb[0].mxu0
    %778 = vdwg.mxu0
    %v779 = vadd.f32 %v706, %v776
    %v780 = vld [vmem:[#allocation3 + $0xa] sm:$0x3]
    %v781 = vsel %vm294, %v703, 0
    %783 = vmatprep.subr.mxu0 0.0
    %784 = vmatpush1.msra.mxu0 %v289
    %785 = vmatprep.subr.mxu0 0.0
    %786 = vmatpush1.msra.mxu0 %v290
    %787 = vmatprep.subr.mxu0 0.0
    %788 = vmatpush1.msra.mxu0 %v291
    %789 = vmatprep.subr.mxu0 0.0
    %790 = vmatpush1.msra.mxu0 %v292
    %791 = vmatprep.subr.mxu0 0.0
    %792 = vmatpush1.msra.mxu0 0.0
    %793 = vmatprep.subr.mxu0 0.0
    %794 = vmatpush1.msra.mxu0 0.0
    %795 = vmatprep.subr.mxu0 0.0
    %796 = vmatpush1.msra.mxu0 0.0
    %797 = vmatprep.subr.mxu0 0.0
    %798 = vmatpush1.msra.mxu0 0.0
    %799 = vmatprep.subr.mxu0 0.0
    %800 = vmatpush1.msra.mxu0 0.0
    %801 = vmatprep.subr.mxu0 0.0
    %802 = vmatpush1.msra.mxu0 0.0
    %803 = vmatprep.subr.mxu0 0.0
    %804 = vmatpush1.msra.mxu0 0.0
    %805 = vmatprep.subr.mxu0 0.0
    %806 = vmatpush1.msra.mxu0 0.0
    %807 = vmatprep.subr.mxu0 0.0
    %808 = vmatpush1.msra.mxu0 0.0
    %809 = vmatprep.subr.mxu0 0.0
    %810 = vmatpush1.msra.mxu0 0.0
    %811 = vmatprep.subr.mxu0 0.0
    %812 = vmatpush1.msra.mxu0 0.0
    %813 = vmatprep.subr.mxu0 0.0
    %814 = vmatpush1.msra.mxu0 0.0
    %815 = vmatprep.subr.mxu0 0.0
    %816 = vmatpush1.msra.mxu0 0.0
    %817 = vmatprep.subr.mxu0 0.0
    %818 = vmatpush1.msra.mxu0 0.0
    %819 = vmatprep.subr.mxu0 0.0
    %820 = vmatpush1.msra.mxu0 0.0
    %821 = vmatprep.subr.mxu0 0.0
    %822 = vmatpush1.msra.mxu0 0.0
    %823 = vmatprep.subr.mxu0 0.0
    %824 = vmatpush1.msra.mxu0 0.0
    %825 = vmatprep.subr.mxu0 0.0
    %826 = vmatpush1.msra.mxu0 0.0
    %827 = vmatprep.subr.mxu0 0.0
    %828 = vmatpush1.msra.mxu0 0.0
    %829 = vmatprep.subr.mxu0 0.0
    %830 = vmatpush1.msra.mxu0 0.0
    %831 = vmatprep.subr.mxu0 0.0
    %832 = vmatpush1.msra.mxu0 0.0
    %833 = vmatprep.subr.mxu0 0.0
    %834 = vmatpush1.msra.mxu0 0.0
    %835 = vmatprep.subr.mxu0 0.0
    %836 = vmatpush1.msra.mxu0 0.0
    %837 = vmatprep.subr.mxu0 0.0
    %838 = vmatpush1.msra.mxu0 0.0
    %839 = vmatprep.subr.mxu0 0.0
    %840 = vmatpush1.msra.mxu0 0.0
    %841 = vmatprep.subr.mxu0 0.0
    %842 = vmatpush1.msra.mxu0 0.0
    %843 = vmatprep.subr.mxu0 0.0
    %844 = vmatpush1.msra.mxu0 0.0
    %845 = vmatprep.subr.mxu0 0.0
    %846 = vmatpush1.msra.mxu0 0.0
    %847 = vmatprep.mubr.f32.mxu0 0.0
    %848 = vmatmul.mubr.f32.gmra.mrb[0].mxu0 %v781
    %v849 = vpop.f32.mrb[0].mxu0
    %v850 = vadd.f32 0.0, %v849
    %v851 = vpop.f32.mrb[0].mxu0
    %852 = vdwg.mxu0
    %v853 = vadd.f32 %v780, %v850
    %v854 = vxor.u32 %v779, 2147483648
    %v855 = vmul.f32 %v854, 1.442695
    %v856 = vpow.pop %v855
    %v857 = vadd.f32 %v856, 1.0
    %v858 = vrcp.pop %v857
    %v859 = vmul.f32 1.0, %v858
    %v860 = vtanh.pop %v779
    %v861 = vmul.f32 %v859, %v665
    %863 = vrot.lane.b32.xlu0 %v860, 32
    %v864 = vpop.permute.xlu0 %863
    %v866 = vmul.f32 %v859, %v864
    %868 = vrot.lane.b32.xlu0 %v866, 32
    %v869 = vpop.permute.xlu0 %868
    %v871 = vadd.f32 %v861, %v869
    %v872 = vtanh.pop %v871
    %874 = vrot.lane.b32.xlu0 %v872, 32
    %v875 = vpop.permute.xlu0 %874
    %v877 = vmul.f32 %v859, %v875
    %v878 = vxor.u32 %v853, 2147483648
    %v879 = vmul.f32 %v878, 1.442695
    %v880 = vpow.pop %v879
    %v881 = vadd.f32 %v880, 1.0
    %v882 = vrcp.pop %v881
    %v883 = vmul.f32 1.0, %v882
    %v884 = vtanh.pop %v853
    %v885 = vmul.f32 %v883, %v689
    %887 = vrot.lane.b32.xlu0 %v884, 32
    %v888 = vpop.permute.xlu0 %887
    %v890 = vmul.f32 %v883, %v888
    %892 = vrot.lane.b32.xlu0 %v890, 32
    %v893 = vpop.permute.xlu0 %892
    %v895 = vadd.f32 %v885, %v893
    %v896 = vtanh.pop %v895
    %898 = vrot.lane.b32.xlu0 %v896, 32
    %v899 = vpop.permute.xlu0 %898
    %v901 = vmul.f32 %v883, %v899
    %903 = vrot.lane.b32.xlu0 %v877, 64
    %v904 = vpop.permute.xlu0 %903
    %906 = vst.msk [vmem:[#allocation4 + $0x4] sm:$0x3] %vm493, %v904
    %908 = vrot.lane.b32.xlu0 %v901, 64
    %v909 = vpop.permute.xlu0 %908
    %911 = vst.msk [vmem:[#allocation5 + $0xa] sm:$0x3] %vm493, %v909
    %v912 = vld [vmem:[#allocation2 + $0x6] sm:$0x3]
    %v913 = vsel %vm294, %v904, 0
    %915 = vmatprep.subr.mxu0 0.0
    %916 = vmatpush1.msra.mxu0 %v285
    %917 = vmatprep.subr.mxu0 0.0
    %918 = vmatpush1.msra.mxu0 %v286
    %919 = vmatprep.subr.mxu0 0.0
    %920 = vmatpush1.msra.mxu0 %v287
    %921 = vmatprep.subr.mxu0 0.0
    %922 = vmatpush1.msra.mxu0 %v288
    %923 = vmatprep.subr.mxu0 0.0
    %924 = vmatpush1.msra.mxu0 0.0
    %925 = vmatprep.subr.mxu0 0.0
    %926 = vmatpush1.msra.mxu0 0.0
    %927 = vmatprep.subr.mxu0 0.0
    %928 = vmatpush1.msra.mxu0 0.0
    %929 = vmatprep.subr.mxu0 0.0
    %930 = vmatpush1.msra.mxu0 0.0
    %931 = vmatprep.subr.mxu0 0.0
    %932 = vmatpush1.msra.mxu0 0.0
    %933 = vmatprep.subr.mxu0 0.0
    %934 = vmatpush1.msra.mxu0 0.0
    %935 = vmatprep.subr.mxu0 0.0
    %936 = vmatpush1.msra.mxu0 0.0
    %937 = vmatprep.subr.mxu0 0.0
    %938 = vmatpush1.msra.mxu0 0.0
    %939 = vmatprep.subr.mxu0 0.0
    %940 = vmatpush1.msra.mxu0 0.0
    %941 = vmatprep.subr.mxu0 0.0
    %942 = vmatpush1.msra.mxu0 0.0
    %943 = vmatprep.subr.mxu0 0.0
    %944 = vmatpush1.msra.mxu0 0.0
    %945 = vmatprep.subr.mxu0 0.0
    %946 = vmatpush1.msra.mxu0 0.0
    %947 = vmatprep.subr.mxu0 0.0
    %948 = vmatpush1.msra.mxu0 0.0
    %949 = vmatprep.subr.mxu0 0.0
    %950 = vmatpush1.msra.mxu0 0.0
    %951 = vmatprep.subr.mxu0 0.0
    %952 = vmatpush1.msra.mxu0 0.0
    %953 = vmatprep.subr.mxu0 0.0
    %954 = vmatpush1.msra.mxu0 0.0
    %955 = vmatprep.subr.mxu0 0.0
    %956 = vmatpush1.msra.mxu0 0.0
    %957 = vmatprep.subr.mxu0 0.0
    %958 = vmatpush1.msra.mxu0 0.0
    %959 = vmatprep.subr.mxu0 0.0
    %960 = vmatpush1.msra.mxu0 0.0
    %961 = vmatprep.subr.mxu0 0.0
    %962 = vmatpush1.msra.mxu0 0.0
    %963 = vmatprep.subr.mxu0 0.0
    %964 = vmatpush1.msra.mxu0 0.0
    %965 = vmatprep.subr.mxu0 0.0
    %966 = vmatpush1.msra.mxu0 0.0
    %967 = vmatprep.subr.mxu0 0.0
    %968 = vmatpush1.msra.mxu0 0.0
    %969 = vmatprep.subr.mxu0 0.0
    %970 = vmatpush1.msra.mxu0 0.0
    %971 = vmatprep.subr.mxu0 0.0
    %972 = vmatpush1.msra.mxu0 0.0
    %973 = vmatprep.subr.mxu0 0.0
    %974 = vmatpush1.msra.mxu0 0.0
    %975 = vmatprep.subr.mxu0 0.0
    %976 = vmatpush1.msra.mxu0 0.0
    %977 = vmatprep.subr.mxu0 0.0
    %978 = vmatpush1.msra.mxu0 0.0
    %979 = vmatprep.mubr.f32.mxu0 0.0
    %980 = vmatmul.mubr.f32.gmra.mrb[0].mxu0 %v913
    %v981 = vpop.f32.mrb[0].mxu0
    %v982 = vadd.f32 0.0, %v981
    %v983 = vpop.f32.mrb[0].mxu0
    %984 = vdwg.mxu0
    %v985 = vadd.f32 %v912, %v982
    %v986 = vld [vmem:[#allocation3 + $0x8] sm:$0x3]
    %v987 = vsel %vm294, %v909, 0
    %989 = vmatprep.subr.mxu0 0.0
    %990 = vmatpush1.msra.mxu0 %v289
    %991 = vmatprep.subr.mxu0 0.0
    %992 = vmatpush1.msra.mxu0 %v290
    %993 = vmatprep.subr.mxu0 0.0
    %994 = vmatpush1.msra.mxu0 %v291
    %995 = vmatprep.subr.mxu0 0.0
    %996 = vmatpush1.msra.mxu0 %v292
    %997 = vmatprep.subr.mxu0 0.0
    %998 = vmatpush1.msra.mxu0 0.0
    %999 = vmatprep.subr.mxu0 0.0
    %1000 = vmatpush1.msra.mxu0 0.0
    %1001 = vmatprep.subr.mxu0 0.0
    %1002 = vmatpush1.msra.mxu0 0.0
    %1003 = vmatprep.subr.mxu0 0.0
    %1004 = vmatpush1.msra.mxu0 0.0
    %1005 = vmatprep.subr.mxu0 0.0
    %1006 = vmatpush1.msra.mxu0 0.0
    %1007 = vmatprep.subr.mxu0 0.0
    %1008 = vmatpush1.msra.mxu0 0.0
    %1009 = vmatprep.subr.mxu0 0.0
    %1010 = vmatpush1.msra.mxu0 0.0
    %1011 = vmatprep.subr.mxu0 0.0
    %1012 = vmatpush1.msra.mxu0 0.0
    %1013 = vmatprep.subr.mxu0 0.0
    %1014 = vmatpush1.msra.mxu0 0.0
    %1015 = vmatprep.subr.mxu0 0.0
    %1016 = vmatpush1.msra.mxu0 0.0
    %1017 = vmatprep.subr.mxu0 0.0
    %1018 = vmatpush1.msra.mxu0 0.0
    %1019 = vmatprep.subr.mxu0 0.0
    %1020 = vmatpush1.msra.mxu0 0.0
    %1021 = vmatprep.subr.mxu0 0.0
    %1022 = vmatpush1.msra.mxu0 0.0
    %1023 = vmatprep.subr.mxu0 0.0
    %1024 = vmatpush1.msra.mxu0 0.0
    %1025 = vmatprep.subr.mxu0 0.0
    %1026 = vmatpush1.msra.mxu0 0.0
    %1027 = vmatprep.subr.mxu0 0.0
    %1028 = vmatpush1.msra.mxu0 0.0
    %1029 = vmatprep.subr.mxu0 0.0
    %1030 = vmatpush1.msra.mxu0 0.0
    %1031 = vmatprep.subr.mxu0 0.0
    %1032 = vmatpush1.msra.mxu0 0.0
    %1033 = vmatprep.subr.mxu0 0.0
    %1034 = vmatpush1.msra.mxu0 0.0
    %1035 = vmatprep.subr.mxu0 0.0
    %1036 = vmatpush1.msra.mxu0 0.0
    %1037 = vmatprep.subr.mxu0 0.0
    %1038 = vmatpush1.msra.mxu0 0.0
    %1039 = vmatprep.subr.mxu0 0.0
    %1040 = vmatpush1.msra.mxu0 0.0
    %1041 = vmatprep.subr.mxu0 0.0
    %1042 = vmatpush1.msra.mxu0 0.0
    %1043 = vmatprep.subr.mxu0 0.0
    %1044 = vmatpush1.msra.mxu0 0.0
    %1045 = vmatprep.subr.mxu0 0.0
    %1046 = vmatpush1.msra.mxu0 0.0
    %1047 = vmatprep.subr.mxu0 0.0
    %1048 = vmatpush1.msra.mxu0 0.0
    %1049 = vmatprep.subr.mxu0 0.0
    %1050 = vmatpush1.msra.mxu0 0.0
    %1051 = vmatprep.subr.mxu0 0.0
    %1052 = vmatpush1.msra.mxu0 0.0
    %1053 = vmatprep.mubr.f32.mxu0 0.0
    %1054 = vmatmul.mubr.f32.gmra.mrb[0].mxu0 %v987
    %v1055 = vpop.f32.mrb[0].mxu0
    %v1056 = vadd.f32 0.0, %v1055
    %v1057 = vpop.f32.mrb[0].mxu0
    %1058 = vdwg.mxu0
    %v1059 = vadd.f32 %v986, %v1056
    %v1060 = vxor.u32 %v985, 2147483648
    %v1061 = vmul.f32 %v1060, 1.442695
    %v1062 = vpow.pop %v1061
    %v1063 = vadd.f32 %v1062, 1.0
    %v1064 = vrcp.pop %v1063
    %v1065 = vmul.f32 1.0, %v1064
    %v1066 = vtanh.pop %v985
    %v1067 = vmul.f32 %v1065, %v871
    %1069 = vrot.lane.b32.xlu0 %v1066, 32
    %v1070 = vpop.permute.xlu0 %1069
    %v1072 = vmul.f32 %v1065, %v1070
    %1074 = vrot.lane.b32.xlu0 %v1072, 32
    %v1075 = vpop.permute.xlu0 %1074
    %v1077 = vadd.f32 %v1067, %v1075
    %v1078 = vtanh.pop %v1077
    %1080 = vrot.lane.b32.xlu0 %v1078, 32
    %v1081 = vpop.permute.xlu0 %1080
    %v1083 = vmul.f32 %v1065, %v1081
    %v1084 = vxor.u32 %v1059, 2147483648
    %v1085 = vmul.f32 %v1084, 1.442695
    %v1086 = vpow.pop %v1085
    %v1087 = vadd.f32 %v1086, 1.0
    %v1088 = vrcp.pop %v1087
    %v1089 = vmul.f32 1.0, %v1088
    %v1090 = vtanh.pop %v1059
    %v1091 = vmul.f32 %v1089, %v895
    %1093 = vrot.lane.b32.xlu0 %v1090, 32
    %v1094 = vpop.permute.xlu0 %1093
    %v1096 = vmul.f32 %v1089, %v1094
    %1098 = vrot.lane.b32.xlu0 %v1096, 32
    %v1099 = vpop.permute.xlu0 %1098
    %v1101 = vadd.f32 %v1091, %v1099
    %v1102 = vtanh.pop %v1101
    %1104 = vrot.lane.b32.xlu0 %v1102, 32
    %v1105 = vpop.permute.xlu0 %1104
    %v1107 = vmul.f32 %v1089, %v1105
    %1109 = vrot.lane.b32.xlu0 %v1083, 64
    %v1110 = vpop.permute.xlu0 %1109
    %1112 = vst.msk [vmem:[#allocation4 + $0x6] sm:$0x3] %vm493, %v1110
    %1114 = vrot.lane.b32.xlu0 %v1107, 64
    %v1115 = vpop.permute.xlu0 %1114
    %1117 = vst.msk [vmem:[#allocation5 + $0x8] sm:$0x3] %vm493, %v1115
    %v1118 = vld [vmem:[#allocation2 + $0x8] sm:$0x3]
    %v1119 = vsel %vm294, %v1110, 0
    %1121 = vmatprep.subr.mxu0 0.0
    %1122 = vmatpush1.msra.mxu0 %v285
    %1123 = vmatprep.subr.mxu0 0.0
    %1124 = vmatpush1.msra.mxu0 %v286
    %1125 = vmatprep.subr.mxu0 0.0
    %1126 = vmatpush1.msra.mxu0 %v287
    %1127 = vmatprep.subr.mxu0 0.0
    %1128 = vmatpush1.msra.mxu0 %v288
    %1129 = vmatprep.subr.mxu0 0.0
    %1130 = vmatpush1.msra.mxu0 0.0
    %1131 = vmatprep.subr.mxu0 0.0
    %1132 = vmatpush1.msra.mxu0 0.0
    %1133 = vmatprep.subr.mxu0 0.0
    %1134 = vmatpush1.msra.mxu0 0.0
    %1135 = vmatprep.subr.mxu0 0.0
    %1136 = vmatpush1.msra.mxu0 0.0
    %1137 = vmatprep.subr.mxu0 0.0
    %1138 = vmatpush1.msra.mxu0 0.0
    %1139 = vmatprep.subr.mxu0 0.0
    %1140 = vmatpush1.msra.mxu0 0.0
    %1141 = vmatprep.subr.mxu0 0.0
    %1142 = vmatpush1.msra.mxu0 0.0
    %1143 = vmatprep.subr.mxu0 0.0
    %1144 = vmatpush1.msra.mxu0 0.0
    %1145 = vmatprep.subr.mxu0 0.0
    %1146 = vmatpush1.msra.mxu0 0.0
    %1147 = vmatprep.subr.mxu0 0.0
    %1148 = vmatpush1.msra.mxu0 0.0
    %1149 = vmatprep.subr.mxu0 0.0
    %1150 = vmatpush1.msra.mxu0 0.0
    %1151 = vmatprep.subr.mxu0 0.0
    %1152 = vmatpush1.msra.mxu0 0.0
    %1153 = vmatprep.subr.mxu0 0.0
    %1154 = vmatpush1.msra.mxu0 0.0
    %1155 = vmatprep.subr.mxu0 0.0
    %1156 = vmatpush1.msra.mxu0 0.0
    %1157 = vmatprep.subr.mxu0 0.0
    %1158 = vmatpush1.msra.mxu0 0.0
    %1159 = vmatprep.subr.mxu0 0.0
    %1160 = vmatpush1.msra.mxu0 0.0
    %1161 = vmatprep.subr.mxu0 0.0
    %1162 = vmatpush1.msra.mxu0 0.0
    %1163 = vmatprep.subr.mxu0 0.0
    %1164 = vmatpush1.msra.mxu0 0.0
    %1165 = vmatprep.subr.mxu0 0.0
    %1166 = vmatpush1.msra.mxu0 0.0
    %1167 = vmatprep.subr.mxu0 0.0
    %1168 = vmatpush1.msra.mxu0 0.0
    %1169 = vmatprep.subr.mxu0 0.0
    %1170 = vmatpush1.msra.mxu0 0.0
    %1171 = vmatprep.subr.mxu0 0.0
    %1172 = vmatpush1.msra.mxu0 0.0
    %1173 = vmatprep.subr.mxu0 0.0
    %1174 = vmatpush1.msra.mxu0 0.0
    %1175 = vmatprep.subr.mxu0 0.0
    %1176 = vmatpush1.msra.mxu0 0.0
    %1177 = vmatprep.subr.mxu0 0.0
    %1178 = vmatpush1.msra.mxu0 0.0
    %1179 = vmatprep.subr.mxu0 0.0
    %1180 = vmatpush1.msra.mxu0 0.0
    %1181 = vmatprep.subr.mxu0 0.0
    %1182 = vmatpush1.msra.mxu0 0.0
    %1183 = vmatprep.subr.mxu0 0.0
    %1184 = vmatpush1.msra.mxu0 0.0
    %1185 = vmatprep.mubr.f32.mxu0 0.0
    %1186 = vmatmul.mubr.f32.gmra.mrb[0].mxu0 %v1119
    %v1187 = vpop.f32.mrb[0].mxu0
    %v1188 = vadd.f32 0.0, %v1187
    %v1189 = vpop.f32.mrb[0].mxu0
    %1190 = vdwg.mxu0
    %v1191 = vadd.f32 %v1118, %v1188
    %v1192 = vld [vmem:[#allocation3 + $0x6] sm:$0x3]
    %v1193 = vsel %vm294, %v1115, 0
    %1195 = vmatprep.subr.mxu0 0.0
    %1196 = vmatpush1.msra.mxu0 %v289
    %1197 = vmatprep.subr.mxu0 0.0
    %1198 = vmatpush1.msra.mxu0 %v290
    %1199 = vmatprep.subr.mxu0 0.0
    %1200 = vmatpush1.msra.mxu0 %v291
    %1201 = vmatprep.subr.mxu0 0.0
    %1202 = vmatpush1.msra.mxu0 %v292
    %1203 = vmatprep.subr.mxu0 0.0
    %1204 = vmatpush1.msra.mxu0 0.0
    %1205 = vmatprep.subr.mxu0 0.0
    %1206 = vmatpush1.msra.mxu0 0.0
    %1207 = vmatprep.subr.mxu0 0.0
    %1208 = vmatpush1.msra.mxu0 0.0
    %1209 = vmatprep.subr.mxu0 0.0
    %1210 = vmatpush1.msra.mxu0 0.0
    %1211 = vmatprep.subr.mxu0 0.0
    %1212 = vmatpush1.msra.mxu0 0.0
    %1213 = vmatprep.subr.mxu0 0.0
    %1214 = vmatpush1.msra.mxu0 0.0
    %1215 = vmatprep.subr.mxu0 0.0
    %1216 = vmatpush1.msra.mxu0 0.0
    %1217 = vmatprep.subr.mxu0 0.0
    %1218 = vmatpush1.msra.mxu0 0.0
    %1219 = vmatprep.subr.mxu0 0.0
    %1220 = vmatpush1.msra.mxu0 0.0
    %1221 = vmatprep.subr.mxu0 0.0
    %1222 = vmatpush1.msra.mxu0 0.0
    %1223 = vmatprep.subr.mxu0 0.0
    %1224 = vmatpush1.msra.mxu0 0.0
    %1225 = vmatprep.subr.mxu0 0.0
    %1226 = vmatpush1.msra.mxu0 0.0
    %1227 = vmatprep.subr.mxu0 0.0
    %1228 = vmatpush1.msra.mxu0 0.0
    %1229 = vmatprep.subr.mxu0 0.0
    %1230 = vmatpush1.msra.mxu0 0.0
    %1231 = vmatprep.subr.mxu0 0.0
    %1232 = vmatpush1.msra.mxu0 0.0
    %1233 = vmatprep.subr.mxu0 0.0
    %1234 = vmatpush1.msra.mxu0 0.0
    %1235 = vmatprep.subr.mxu0 0.0
    %1236 = vmatpush1.msra.mxu0 0.0
    %1237 = vmatprep.subr.mxu0 0.0
    %1238 = vmatpush1.msra.mxu0 0.0
    %1239 = vmatprep.subr.mxu0 0.0
    %1240 = vmatpush1.msra.mxu0 0.0
    %1241 = vmatprep.subr.mxu0 0.0
    %1242 = vmatpush1.msra.mxu0 0.0
    %1243 = vmatprep.subr.mxu0 0.0
    %1244 = vmatpush1.msra.mxu0 0.0
    %1245 = vmatprep.subr.mxu0 0.0
    %1246 = vmatpush1.msra.mxu0 0.0
    %1247 = vmatprep.subr.mxu0 0.0
    %1248 = vmatpush1.msra.mxu0 0.0
    %1249 = vmatprep.subr.mxu0 0.0
    %1250 = vmatpush1.msra.mxu0 0.0
    %1251 = vmatprep.subr.mxu0 0.0
    %1252 = vmatpush1.msra.mxu0 0.0
    %1253 = vmatprep.subr.mxu0 0.0
    %1254 = vmatpush1.msra.mxu0 0.0
    %1255 = vmatprep.subr.mxu0 0.0
    %1256 = vmatpush1.msra.mxu0 0.0
    %1257 = vmatprep.subr.mxu0 0.0
    %1258 = vmatpush1.msra.mxu0 0.0
    %1259 = vmatprep.mubr.f32.mxu0 0.0
    %1260 = vmatmul.mubr.f32.gmra.mrb[0].mxu0 %v1193
    %v1261 = vpop.f32.mrb[0].mxu0
    %v1262 = vadd.f32 0.0, %v1261
    %v1263 = vpop.f32.mrb[0].mxu0
    %1264 = vdwg.mxu0
    %v1265 = vadd.f32 %v1192, %v1262
    %v1266 = vxor.u32 %v1191, 2147483648
    %v1267 = vmul.f32 %v1266, 1.442695
    %v1268 = vpow.pop %v1267
    %v1269 = vadd.f32 %v1268, 1.0
    %v1270 = vrcp.pop %v1269
    %v1271 = vmul.f32 1.0, %v1270
    %v1272 = vtanh.pop %v1191
    %v1273 = vmul.f32 %v1271, %v1077
    %1275 = vrot.lane.b32.xlu0 %v1272, 32
    %v1276 = vpop.permute.xlu0 %1275
    %v1278 = vmul.f32 %v1271, %v1276
    %1280 = vrot.lane.b32.xlu0 %v1278, 32
    %v1281 = vpop.permute.xlu0 %1280
    %v1283 = vadd.f32 %v1273, %v1281
    %v1284 = vtanh.pop %v1283
    %1286 = vrot.lane.b32.xlu0 %v1284, 32
    %v1287 = vpop.permute.xlu0 %1286
    %v1289 = vmul.f32 %v1271, %v1287
    %v1290 = vxor.u32 %v1265, 2147483648
    %v1291 = vmul.f32 %v1290, 1.442695
    %v1292 = vpow.pop %v1291
    %v1293 = vadd.f32 %v1292, 1.0
    %v1294 = vrcp.pop %v1293
    %v1295 = vmul.f32 1.0, %v1294
    %v1296 = vtanh.pop %v1265
    %v1297 = vmul.f32 %v1295, %v1101
    %1299 = vrot.lane.b32.xlu0 %v1296, 32
    %v1300 = vpop.permute.xlu0 %1299
    %v1302 = vmul.f32 %v1295, %v1300
    %1304 = vrot.lane.b32.xlu0 %v1302, 32
    %v1305 = vpop.permute.xlu0 %1304
    %v1307 = vadd.f32 %v1297, %v1305
    %v1308 = vtanh.pop %v1307
    %1310 = vrot.lane.b32.xlu0 %v1308, 32
    %v1311 = vpop.permute.xlu0 %1310
    %v1313 = vmul.f32 %v1295, %v1311
    %1315 = vrot.lane.b32.xlu0 %v1289, 64
    %v1316 = vpop.permute.xlu0 %1315
    %1318 = vst.msk [vmem:[#allocation4 + $0x8] sm:$0x3] %vm493, %v1316
    %1320 = vrot.lane.b32.xlu0 %v1313, 64
    %v1321 = vpop.permute.xlu0 %1320
    %1323 = vst.msk [vmem:[#allocation5 + $0x6] sm:$0x3] %vm493, %v1321
    %v1324 = vld [vmem:[#allocation2 + $0xa] sm:$0x3]
    %v1325 = vsel %vm294, %v1316, 0
    %1327 = vmatprep.subr.mxu0 0.0
    %1328 = vmatpush1.msra.mxu0 %v285
    %1329 = vmatprep.subr.mxu0 0.0
    %1330 = vmatpush1.msra.mxu0 %v286
    %1331 = vmatprep.subr.mxu0 0.0
    %1332 = vmatpush1.msra.mxu0 %v287
    %1333 = vmatprep.subr.mxu0 0.0
    %1334 = vmatpush1.msra.mxu0 %v288
    %1335 = vmatprep.subr.mxu0 0.0
    %1336 = vmatpush1.msra.mxu0 0.0
    %1337 = vmatprep.subr.mxu0 0.0
    %1338 = vmatpush1.msra.mxu0 0.0
    %1339 = vmatprep.subr.mxu0 0.0
    %1340 = vmatpush1.msra.mxu0 0.0
    %1341 = vmatprep.subr.mxu0 0.0
    %1342 = vmatpush1.msra.mxu0 0.0
    %1343 = vmatprep.subr.mxu0 0.0
    %1344 = vmatpush1.msra.mxu0 0.0
    %1345 = vmatprep.subr.mxu0 0.0
    %1346 = vmatpush1.msra.mxu0 0.0
    %1347 = vmatprep.subr.mxu0 0.0
    %1348 = vmatpush1.msra.mxu0 0.0
    %1349 = vmatprep.subr.mxu0 0.0
    %1350 = vmatpush1.msra.mxu0 0.0
    %1351 = vmatprep.subr.mxu0 0.0
    %1352 = vmatpush1.msra.mxu0 0.0
    %1353 = vmatprep.subr.mxu0 0.0
    %1354 = vmatpush1.msra.mxu0 0.0
    %1355 = vmatprep.subr.mxu0 0.0
    %1356 = vmatpush1.msra.mxu0 0.0
    %1357 = vmatprep.subr.mxu0 0.0
    %1358 = vmatpush1.msra.mxu0 0.0
    %1359 = vmatprep.subr.mxu0 0.0
    %1360 = vmatpush1.msra.mxu0 0.0
    %1361 = vmatprep.subr.mxu0 0.0
    %1362 = vmatpush1.msra.mxu0 0.0
    %1363 = vmatprep.subr.mxu0 0.0
    %1364 = vmatpush1.msra.mxu0 0.0
    %1365 = vmatprep.subr.mxu0 0.0
    %1366 = vmatpush1.msra.mxu0 0.0
    %1367 = vmatprep.subr.mxu0 0.0
    %1368 = vmatpush1.msra.mxu0 0.0
    %1369 = vmatprep.subr.mxu0 0.0
    %1370 = vmatpush1.msra.mxu0 0.0
    %1371 = vmatprep.subr.mxu0 0.0
    %1372 = vmatpush1.msra.mxu0 0.0
    %1373 = vmatprep.subr.mxu0 0.0
    %1374 = vmatpush1.msra.mxu0 0.0
    %1375 = vmatprep.subr.mxu0 0.0
    %1376 = vmatpush1.msra.mxu0 0.0
    %1377 = vmatprep.subr.mxu0 0.0
    %1378 = vmatpush1.msra.mxu0 0.0
    %1379 = vmatprep.subr.mxu0 0.0
    %1380 = vmatpush1.msra.mxu0 0.0
    %1381 = vmatprep.subr.mxu0 0.0
    %1382 = vmatpush1.msra.mxu0 0.0
    %1383 = vmatprep.subr.mxu0 0.0
    %1384 = vmatpush1.msra.mxu0 0.0
    %1385 = vmatprep.subr.mxu0 0.0
    %1386 = vmatpush1.msra.mxu0 0.0
    %1387 = vmatprep.subr.mxu0 0.0
    %1388 = vmatpush1.msra.mxu0 0.0
    %1389 = vmatprep.subr.mxu0 0.0
    %1390 = vmatpush1.msra.mxu0 0.0
    %1391 = vmatprep.mubr.f32.mxu0 0.0
    %1392 = vmatmul.mubr.f32.gmra.mrb[0].mxu0 %v1325
    %v1393 = vpop.f32.mrb[0].mxu0
    %v1394 = vadd.f32 0.0, %v1393
    %v1395 = vpop.f32.mrb[0].mxu0
    %1396 = vdwg.mxu0
    %v1397 = vadd.f32 %v1324, %v1394
    %v1398 = vld [vmem:[#allocation3 + $0x4] sm:$0x3]
    %v1399 = vsel %vm294, %v1321, 0
    %1401 = vmatprep.subr.mxu0 0.0
    %1402 = vmatpush1.msra.mxu0 %v289
    %1403 = vmatprep.subr.mxu0 0.0
    %1404 = vmatpush1.msra.mxu0 %v290
    %1405 = vmatprep.subr.mxu0 0.0
    %1406 = vmatpush1.msra.mxu0 %v291
    %1407 = vmatprep.subr.mxu0 0.0
    %1408 = vmatpush1.msra.mxu0 %v292
    %1409 = vmatprep.subr.mxu0 0.0
    %1410 = vmatpush1.msra.mxu0 0.0
    %1411 = vmatprep.subr.mxu0 0.0
    %1412 = vmatpush1.msra.mxu0 0.0
    %1413 = vmatprep.subr.mxu0 0.0
    %1414 = vmatpush1.msra.mxu0 0.0
    %1415 = vmatprep.subr.mxu0 0.0
    %1416 = vmatpush1.msra.mxu0 0.0
    %1417 = vmatprep.subr.mxu0 0.0
    %1418 = vmatpush1.msra.mxu0 0.0
    %1419 = vmatprep.subr.mxu0 0.0
    %1420 = vmatpush1.msra.mxu0 0.0
    %1421 = vmatprep.subr.mxu0 0.0
    %1422 = vmatpush1.msra.mxu0 0.0
    %1423 = vmatprep.subr.mxu0 0.0
    %1424 = vmatpush1.msra.mxu0 0.0
    %1425 = vmatprep.subr.mxu0 0.0
    %1426 = vmatpush1.msra.mxu0 0.0
    %1427 = vmatprep.subr.mxu0 0.0
    %1428 = vmatpush1.msra.mxu0 0.0
    %1429 = vmatprep.subr.mxu0 0.0
    %1430 = vmatpush1.msra.mxu0 0.0
    %1431 = vmatprep.subr.mxu0 0.0
    %1432 = vmatpush1.msra.mxu0 0.0
    %1433 = vmatprep.subr.mxu0 0.0
    %1434 = vmatpush1.msra.mxu0 0.0
    %1435 = vmatprep.subr.mxu0 0.0
    %1436 = vmatpush1.msra.mxu0 0.0
    %1437 = vmatprep.subr.mxu0 0.0
    %1438 = vmatpush1.msra.mxu0 0.0
    %1439 = vmatprep.subr.mxu0 0.0
    %1440 = vmatpush1.msra.mxu0 0.0
    %1441 = vmatprep.subr.mxu0 0.0
    %1442 = vmatpush1.msra.mxu0 0.0
    %1443 = vmatprep.subr.mxu0 0.0
    %1444 = vmatpush1.msra.mxu0 0.0
    %1445 = vmatprep.subr.mxu0 0.0
    %1446 = vmatpush1.msra.mxu0 0.0
    %1447 = vmatprep.subr.mxu0 0.0
    %1448 = vmatpush1.msra.mxu0 0.0
    %1449 = vmatprep.subr.mxu0 0.0
    %1450 = vmatpush1.msra.mxu0 0.0
    %1451 = vmatprep.subr.mxu0 0.0
    %1452 = vmatpush1.msra.mxu0 0.0
    %1453 = vmatprep.subr.mxu0 0.0
    %1454 = vmatpush1.msra.mxu0 0.0
    %1455 = vmatprep.subr.mxu0 0.0
    %1456 = vmatpush1.msra.mxu0 0.0
    %1457 = vmatprep.subr.mxu0 0.0
    %1458 = vmatpush1.msra.mxu0 0.0
    %1459 = vmatprep.subr.mxu0 0.0
    %1460 = vmatpush1.msra.mxu0 0.0
    %1461 = vmatprep.subr.mxu0 0.0
    %1462 = vmatpush1.msra.mxu0 0.0
    %1463 = vmatprep.subr.mxu0 0.0
    %1464 = vmatpush1.msra.mxu0 0.0
    %1465 = vmatprep.mubr.f32.mxu0 0.0
    %1466 = vmatmul.mubr.f32.gmra.mrb[0].mxu0 %v1399
    %v1467 = vpop.f32.mrb[0].mxu0
    %v1468 = vadd.f32 0.0, %v1467
    %v1469 = vpop.f32.mrb[0].mxu0
    %1470 = vdwg.mxu0
    %v1471 = vadd.f32 %v1398, %v1468
    %v1472 = vxor.u32 %v1397, 2147483648
    %v1473 = vmul.f32 %v1472, 1.442695
    %v1474 = vpow.pop %v1473
    %v1475 = vadd.f32 %v1474, 1.0
    %v1476 = vrcp.pop %v1475
    %v1477 = vmul.f32 1.0, %v1476
    %v1478 = vtanh.pop %v1397
    %v1479 = vmul.f32 %v1477, %v1283
    %1481 = vrot.lane.b32.xlu0 %v1478, 32
    %v1482 = vpop.permute.xlu0 %1481
    %v1484 = vmul.f32 %v1477, %v1482
    %1486 = vrot.lane.b32.xlu0 %v1484, 32
    %v1487 = vpop.permute.xlu0 %1486
    %v1489 = vadd.f32 %v1479, %v1487
    %v1490 = vtanh.pop %v1489
    %1492 = vrot.lane.b32.xlu0 %v1490, 32
    %v1493 = vpop.permute.xlu0 %1492
    %v1495 = vmul.f32 %v1477, %v1493
    %v1496 = vxor.u32 %v1471, 2147483648
    %v1497 = vmul.f32 %v1496, 1.442695
    %v1498 = vpow.pop %v1497
    %v1499 = vadd.f32 %v1498, 1.0
    %v1500 = vrcp.pop %v1499
    %v1501 = vmul.f32 1.0, %v1500
    %v1502 = vtanh.pop %v1471
    %v1503 = vmul.f32 %v1501, %v1307
    %1505 = vrot.lane.b32.xlu0 %v1502, 32
    %v1506 = vpop.permute.xlu0 %1505
    %v1508 = vmul.f32 %v1501, %v1506
    %1510 = vrot.lane.b32.xlu0 %v1508, 32
    %v1511 = vpop.permute.xlu0 %1510
    %v1513 = vadd.f32 %v1503, %v1511
    %v1514 = vtanh.pop %v1513
    %1516 = vrot.lane.b32.xlu0 %v1514, 32
    %v1517 = vpop.permute.xlu0 %1516
    %v1519 = vmul.f32 %v1501, %v1517
    %1521 = vrot.lane.b32.xlu0 %v1495, 64
    %v1522 = vpop.permute.xlu0 %1521
    %1524 = vst.msk [vmem:[#allocation4 + $0xa] sm:$0x3] %vm493, %v1522
    %1526 = vrot.lane.b32.xlu0 %v1519, 64
    %v1527 = vpop.permute.xlu0 %1526
    %1529 = vst.msk [vmem:[#allocation5 + $0x4] sm:$0x3] %vm493, %v1527
    %v1530 = vld [vmem:[#allocation2 + $0xc] sm:$0x3]
    %v1531 = vsel %vm294, %v1522, 0
    %1533 = vmatprep.subr.mxu0 0.0
    %1534 = vmatpush1.msra.mxu0 %v285
    %1535 = vmatprep.subr.mxu0 0.0
    %1536 = vmatpush1.msra.mxu0 %v286
    %1537 = vmatprep.subr.mxu0 0.0
    %1538 = vmatpush1.msra.mxu0 %v287
    %1539 = vmatprep.subr.mxu0 0.0
    %1540 = vmatpush1.msra.mxu0 %v288
    %1541 = vmatprep.subr.mxu0 0.0
    %1542 = vmatpush1.msra.mxu0 0.0
    %1543 = vmatprep.subr.mxu0 0.0
    %1544 = vmatpush1.msra.mxu0 0.0
    %1545 = vmatprep.subr.mxu0 0.0
    %1546 = vmatpush1.msra.mxu0 0.0
    %1547 = vmatprep.subr.mxu0 0.0
    %1548 = vmatpush1.msra.mxu0 0.0
    %1549 = vmatprep.subr.mxu0 0.0
    %1550 = vmatpush1.msra.mxu0 0.0
    %1551 = vmatprep.subr.mxu0 0.0
    %1552 = vmatpush1.msra.mxu0 0.0
    %1553 = vmatprep.subr.mxu0 0.0
    %1554 = vmatpush1.msra.mxu0 0.0
    %1555 = vmatprep.subr.mxu0 0.0
    %1556 = vmatpush1.msra.mxu0 0.0
    %1557 = vmatprep.subr.mxu0 0.0
    %1558 = vmatpush1.msra.mxu0 0.0
    %1559 = vmatprep.subr.mxu0 0.0
    %1560 = vmatpush1.msra.mxu0 0.0
    %1561 = vmatprep.subr.mxu0 0.0
    %1562 = vmatpush1.msra.mxu0 0.0
    %1563 = vmatprep.subr.mxu0 0.0
    %1564 = vmatpush1.msra.mxu0 0.0
    %1565 = vmatprep.subr.mxu0 0.0
    %1566 = vmatpush1.msra.mxu0 0.0
    %1567 = vmatprep.subr.mxu0 0.0
    %1568 = vmatpush1.msra.mxu0 0.0
    %1569 = vmatprep.subr.mxu0 0.0
    %1570 = vmatpush1.msra.mxu0 0.0
    %1571 = vmatprep.subr.mxu0 0.0
    %1572 = vmatpush1.msra.mxu0 0.0
    %1573 = vmatprep.subr.mxu0 0.0
    %1574 = vmatpush1.msra.mxu0 0.0
    %1575 = vmatprep.subr.mxu0 0.0
    %1576 = vmatpush1.msra.mxu0 0.0
    %1577 = vmatprep.subr.mxu0 0.0
    %1578 = vmatpush1.msra.mxu0 0.0
    %1579 = vmatprep.subr.mxu0 0.0
    %1580 = vmatpush1.msra.mxu0 0.0
    %1581 = vmatprep.subr.mxu0 0.0
    %1582 = vmatpush1.msra.mxu0 0.0
    %1583 = vmatprep.subr.mxu0 0.0
    %1584 = vmatpush1.msra.mxu0 0.0
    %1585 = vmatprep.subr.mxu0 0.0
    %1586 = vmatpush1.msra.mxu0 0.0
    %1587 = vmatprep.subr.mxu0 0.0
    %1588 = vmatpush1.msra.mxu0 0.0
    %1589 = vmatprep.subr.mxu0 0.0
    %1590 = vmatpush1.msra.mxu0 0.0
    %1591 = vmatprep.subr.mxu0 0.0
    %1592 = vmatpush1.msra.mxu0 0.0
    %1593 = vmatprep.subr.mxu0 0.0
    %1594 = vmatpush1.msra.mxu0 0.0
    %1595 = vmatprep.subr.mxu0 0.0
    %1596 = vmatpush1.msra.mxu0 0.0
    %1597 = vmatprep.mubr.f32.mxu0 0.0
    %1598 = vmatmul.mubr.f32.gmra.mrb[0].mxu0 %v1531
    %v1599 = vpop.f32.mrb[0].mxu0
    %v1600 = vadd.f32 0.0, %v1599
    %v1601 = vpop.f32.mrb[0].mxu0
    %1602 = vdwg.mxu0
    %v1603 = vadd.f32 %v1530, %v1600
    %v1604 = vld [vmem:[#allocation3 + $0x2] sm:$0x3]
    %v1605 = vsel %vm294, %v1527, 0
    %1607 = vmatprep.subr.mxu0 0.0
    %1608 = vmatpush1.msra.mxu0 %v289
    %1609 = vmatprep.subr.mxu0 0.0
    %1610 = vmatpush1.msra.mxu0 %v290
    %1611 = vmatprep.subr.mxu0 0.0
    %1612 = vmatpush1.msra.mxu0 %v291
    %1613 = vmatprep.subr.mxu0 0.0
    %1614 = vmatpush1.msra.mxu0 %v292
    %1615 = vmatprep.subr.mxu0 0.0
    %1616 = vmatpush1.msra.mxu0 0.0
    %1617 = vmatprep.subr.mxu0 0.0
    %1618 = vmatpush1.msra.mxu0 0.0
    %1619 = vmatprep.subr.mxu0 0.0
    %1620 = vmatpush1.msra.mxu0 0.0
    %1621 = vmatprep.subr.mxu0 0.0
    %1622 = vmatpush1.msra.mxu0 0.0
    %1623 = vmatprep.subr.mxu0 0.0
    %1624 = vmatpush1.msra.mxu0 0.0
    %1625 = vmatprep.subr.mxu0 0.0
    %1626 = vmatpush1.msra.mxu0 0.0
    %1627 = vmatprep.subr.mxu0 0.0
    %1628 = vmatpush1.msra.mxu0 0.0
    %1629 = vmatprep.subr.mxu0 0.0
    %1630 = vmatpush1.msra.mxu0 0.0
    %1631 = vmatprep.subr.mxu0 0.0
    %1632 = vmatpush1.msra.mxu0 0.0
    %1633 = vmatprep.subr.mxu0 0.0
    %1634 = vmatpush1.msra.mxu0 0.0
    %1635 = vmatprep.subr.mxu0 0.0
    %1636 = vmatpush1.msra.mxu0 0.0
    %1637 = vmatprep.subr.mxu0 0.0
    %1638 = vmatpush1.msra.mxu0 0.0
    %1639 = vmatprep.subr.mxu0 0.0
    %1640 = vmatpush1.msra.mxu0 0.0
    %1641 = vmatprep.subr.mxu0 0.0
    %1642 = vmatpush1.msra.mxu0 0.0
    %1643 = vmatprep.subr.mxu0 0.0
    %1644 = vmatpush1.msra.mxu0 0.0
    %1645 = vmatprep.subr.mxu0 0.0
    %1646 = vmatpush1.msra.mxu0 0.0
    %1647 = vmatprep.subr.mxu0 0.0
    %1648 = vmatpush1.msra.mxu0 0.0
    %1649 = vmatprep.subr.mxu0 0.0
    %1650 = vmatpush1.msra.mxu0 0.0
    %1651 = vmatprep.subr.mxu0 0.0
    %1652 = vmatpush1.msra.mxu0 0.0
    %1653 = vmatprep.subr.mxu0 0.0
    %1654 = vmatpush1.msra.mxu0 0.0
    %1655 = vmatprep.subr.mxu0 0.0
    %1656 = vmatpush1.msra.mxu0 0.0
    %1657 = vmatprep.subr.mxu0 0.0
    %1658 = vmatpush1.msra.mxu0 0.0
    %1659 = vmatprep.subr.mxu0 0.0
    %1660 = vmatpush1.msra.mxu0 0.0
    %1661 = vmatprep.subr.mxu0 0.0
    %1662 = vmatpush1.msra.mxu0 0.0
    %1663 = vmatprep.subr.mxu0 0.0
    %1664 = vmatpush1.msra.mxu0 0.0
    %1665 = vmatprep.subr.mxu0 0.0
    %1666 = vmatpush1.msra.mxu0 0.0
    %1667 = vmatprep.subr.mxu0 0.0
    %1668 = vmatpush1.msra.mxu0 0.0
    %1669 = vmatprep.subr.mxu0 0.0
    %1670 = vmatpush1.msra.mxu0 0.0
    %1671 = vmatprep.mubr.f32.mxu0 0.0
    %1672 = vmatmul.mubr.f32.gmra.mrb[0].mxu0 %v1605
    %v1673 = vpop.f32.mrb[0].mxu0
    %v1674 = vadd.f32 0.0, %v1673
    %v1675 = vpop.f32.mrb[0].mxu0
    %1676 = vdwg.mxu0
    %v1677 = vadd.f32 %v1604, %v1674
    %v1678 = vxor.u32 %v1603, 2147483648
    %v1679 = vmul.f32 %v1678, 1.442695
    %v1680 = vpow.pop %v1679
    %v1681 = vadd.f32 %v1680, 1.0
    %v1682 = vrcp.pop %v1681
    %v1683 = vmul.f32 1.0, %v1682
    %v1684 = vtanh.pop %v1603
    %v1685 = vmul.f32 %v1683, %v1489
    %1687 = vrot.lane.b32.xlu0 %v1684, 32
    %v1688 = vpop.permute.xlu0 %1687
    %v1690 = vmul.f32 %v1683, %v1688
    %1692 = vrot.lane.b32.xlu0 %v1690, 32
    %v1693 = vpop.permute.xlu0 %1692
    %v1695 = vadd.f32 %v1685, %v1693
    %v1696 = vtanh.pop %v1695
    %1698 = vrot.lane.b32.xlu0 %v1696, 32
    %v1699 = vpop.permute.xlu0 %1698
    %v1701 = vmul.f32 %v1683, %v1699
    %v1702 = vxor.u32 %v1677, 2147483648
    %v1703 = vmul.f32 %v1702, 1.442695
    %v1704 = vpow.pop %v1703
    %v1705 = vadd.f32 %v1704, 1.0
    %v1706 = vrcp.pop %v1705
    %v1707 = vmul.f32 1.0, %v1706
    %v1708 = vtanh.pop %v1677
    %v1709 = vmul.f32 %v1707, %v1513
    %1711 = vrot.lane.b32.xlu0 %v1708, 32
    %v1712 = vpop.permute.xlu0 %1711
    %v1714 = vmul.f32 %v1707, %v1712
    %1716 = vrot.lane.b32.xlu0 %v1714, 32
    %v1717 = vpop.permute.xlu0 %1716
    %v1719 = vadd.f32 %v1709, %v1717
    %v1720 = vtanh.pop %v1719
    %1722 = vrot.lane.b32.xlu0 %v1720, 32
    %v1723 = vpop.permute.xlu0 %1722
    %v1725 = vmul.f32 %v1707, %v1723
    %1727 = vrot.lane.b32.xlu0 %v1701, 64
    %v1728 = vpop.permute.xlu0 %1727
    %1730 = vst.msk [vmem:[#allocation4 + $0xc] sm:$0x3] %vm493, %v1728
    %1732 = vrot.lane.b32.xlu0 %v1725, 64
    %v1733 = vpop.permute.xlu0 %1732
    %1735 = vst.msk [vmem:[#allocation5 + $0x2] sm:$0x3] %vm493, %v1733
    %v1736 = vld [vmem:[#allocation2 + $0xe] sm:$0x3]
    %v1737 = vsel %vm294, %v1728, 0
    %1739 = vmatprep.subr.mxu0 0.0
    %1740 = vmatpush1.msra.mxu0 %v285
    %1741 = vmatprep.subr.mxu0 0.0
    %1742 = vmatpush1.msra.mxu0 %v286
    %1743 = vmatprep.subr.mxu0 0.0
    %1744 = vmatpush1.msra.mxu0 %v287
    %1745 = vmatprep.subr.mxu0 0.0
    %1746 = vmatpush1.msra.mxu0 %v288
    %1747 = vmatprep.subr.mxu0 0.0
    %1748 = vmatpush1.msra.mxu0 0.0
    %1749 = vmatprep.subr.mxu0 0.0
    %1750 = vmatpush1.msra.mxu0 0.0
    %1751 = vmatprep.subr.mxu0 0.0
    %1752 = vmatpush1.msra.mxu0 0.0
    %1753 = vmatprep.subr.mxu0 0.0
    %1754 = vmatpush1.msra.mxu0 0.0
    %1755 = vmatprep.subr.mxu0 0.0
    %1756 = vmatpush1.msra.mxu0 0.0
    %1757 = vmatprep.subr.mxu0 0.0
    %1758 = vmatpush1.msra.mxu0 0.0
    %1759 = vmatprep.subr.mxu0 0.0
    %1760 = vmatpush1.msra.mxu0 0.0
    %1761 = vmatprep.subr.mxu0 0.0
    %1762 = vmatpush1.msra.mxu0 0.0
    %1763 = vmatprep.subr.mxu0 0.0
    %1764 = vmatpush1.msra.mxu0 0.0
    %1765 = vmatprep.subr.mxu0 0.0
    %1766 = vmatpush1.msra.mxu0 0.0
    %1767 = vmatprep.subr.mxu0 0.0
    %1768 = vmatpush1.msra.mxu0 0.0
    %1769 = vmatprep.subr.mxu0 0.0
    %1770 = vmatpush1.msra.mxu0 0.0
    %1771 = vmatprep.subr.mxu0 0.0
    %1772 = vmatpush1.msra.mxu0 0.0
    %1773 = vmatprep.subr.mxu0 0.0
    %1774 = vmatpush1.msra.mxu0 0.0
    %1775 = vmatprep.subr.mxu0 0.0
    %1776 = vmatpush1.msra.mxu0 0.0
    %1777 = vmatprep.subr.mxu0 0.0
    %1778 = vmatpush1.msra.mxu0 0.0
    %1779 = vmatprep.subr.mxu0 0.0
    %1780 = vmatpush1.msra.mxu0 0.0
    %1781 = vmatprep.subr.mxu0 0.0
    %1782 = vmatpush1.msra.mxu0 0.0
    %1783 = vmatprep.subr.mxu0 0.0
    %1784 = vmatpush1.msra.mxu0 0.0
    %1785 = vmatprep.subr.mxu0 0.0
    %1786 = vmatpush1.msra.mxu0 0.0
    %1787 = vmatprep.subr.mxu0 0.0
    %1788 = vmatpush1.msra.mxu0 0.0
    %1789 = vmatprep.subr.mxu0 0.0
    %1790 = vmatpush1.msra.mxu0 0.0
    %1791 = vmatprep.subr.mxu0 0.0
    %1792 = vmatpush1.msra.mxu0 0.0
    %1793 = vmatprep.subr.mxu0 0.0
    %1794 = vmatpush1.msra.mxu0 0.0
    %1795 = vmatprep.subr.mxu0 0.0
    %1796 = vmatpush1.msra.mxu0 0.0
    %1797 = vmatprep.subr.mxu0 0.0
    %1798 = vmatpush1.msra.mxu0 0.0
    %1799 = vmatprep.subr.mxu0 0.0
    %1800 = vmatpush1.msra.mxu0 0.0
    %1801 = vmatprep.subr.mxu0 0.0
    %1802 = vmatpush1.msra.mxu0 0.0
    %1803 = vmatprep.mubr.f32.mxu0 0.0
    %1804 = vmatmul.mubr.f32.gmra.mrb[0].mxu0 %v1737
    %v1805 = vpop.f32.mrb[0].mxu0
    %v1806 = vadd.f32 0.0, %v1805
    %v1807 = vpop.f32.mrb[0].mxu0
    %1808 = vdwg.mxu0
    %v1809 = vadd.f32 %v1736, %v1806
    %v1810 = vld [vmem:[#allocation3] sm:$0x3]
    %v1811 = vsel %vm294, %v1733, 0
    %1813 = vmatprep.subr.mxu0 0.0
    %1814 = vmatpush1.msra.mxu0 %v289
    %1815 = vmatprep.subr.mxu0 0.0
    %1816 = vmatpush1.msra.mxu0 %v290
    %1817 = vmatprep.subr.mxu0 0.0
    %1818 = vmatpush1.msra.mxu0 %v291
    %1819 = vmatprep.subr.mxu0 0.0
    %1820 = vmatpush1.msra.mxu0 %v292
    %1821 = vmatprep.subr.mxu0 0.0
    %1822 = vmatpush1.msra.mxu0 0.0
    %1823 = vmatprep.subr.mxu0 0.0
    %1824 = vmatpush1.msra.mxu0 0.0
    %1825 = vmatprep.subr.mxu0 0.0
    %1826 = vmatpush1.msra.mxu0 0.0
    %1827 = vmatprep.subr.mxu0 0.0
    %1828 = vmatpush1.msra.mxu0 0.0
    %1829 = vmatprep.subr.mxu0 0.0
    %1830 = vmatpush1.msra.mxu0 0.0
    %1831 = vmatprep.subr.mxu0 0.0
    %1832 = vmatpush1.msra.mxu0 0.0
    %1833 = vmatprep.subr.mxu0 0.0
    %1834 = vmatpush1.msra.mxu0 0.0
    %1835 = vmatprep.subr.mxu0 0.0
    %1836 = vmatpush1.msra.mxu0 0.0
    %1837 = vmatprep.subr.mxu0 0.0
    %1838 = vmatpush1.msra.mxu0 0.0
    %1839 = vmatprep.subr.mxu0 0.0
    %1840 = vmatpush1.msra.mxu0 0.0
    %1841 = vmatprep.subr.mxu0 0.0
    %1842 = vmatpush1.msra.mxu0 0.0
    %1843 = vmatprep.subr.mxu0 0.0
    %1844 = vmatpush1.msra.mxu0 0.0
    %1845 = vmatprep.subr.mxu0 0.0
    %1846 = vmatpush1.msra.mxu0 0.0
    %1847 = vmatprep.subr.mxu0 0.0
    %1848 = vmatpush1.msra.mxu0 0.0
    %1849 = vmatprep.subr.mxu0 0.0
    %1850 = vmatpush1.msra.mxu0 0.0
    %1851 = vmatprep.subr.mxu0 0.0
    %1852 = vmatpush1.msra.mxu0 0.0
    %1853 = vmatprep.subr.mxu0 0.0
    %1854 = vmatpush1.msra.mxu0 0.0
    %1855 = vmatprep.subr.mxu0 0.0
    %1856 = vmatpush1.msra.mxu0 0.0
    %1857 = vmatprep.subr.mxu0 0.0
    %1858 = vmatpush1.msra.mxu0 0.0
    %1859 = vmatprep.subr.mxu0 0.0
    %1860 = vmatpush1.msra.mxu0 0.0
    %1861 = vmatprep.subr.mxu0 0.0
    %1862 = vmatpush1.msra.mxu0 0.0
    %1863 = vmatprep.subr.mxu0 0.0
    %1864 = vmatpush1.msra.mxu0 0.0
    %1865 = vmatprep.subr.mxu0 0.0
    %1866 = vmatpush1.msra.mxu0 0.0
    %1867 = vmatprep.subr.mxu0 0.0
    %1868 = vmatpush1.msra.mxu0 0.0
    %1869 = vmatprep.subr.mxu0 0.0
    %1870 = vmatpush1.msra.mxu0 0.0
    %1871 = vmatprep.subr.mxu0 0.0
    %1872 = vmatpush1.msra.mxu0 0.0
    %1873 = vmatprep.subr.mxu0 0.0
    %1874 = vmatpush1.msra.mxu0 0.0
    %1875 = vmatprep.subr.mxu0 0.0
    %1876 = vmatpush1.msra.mxu0 0.0
    %1877 = vmatprep.mubr.f32.mxu0 0.0
    %1878 = vmatmul.mubr.f32.gmra.mrb[0].mxu0 %v1811
    %v1879 = vpop.f32.mrb[0].mxu0
    %v1880 = vadd.f32 0.0, %v1879
    %v1881 = vpop.f32.mrb[0].mxu0
    %1882 = vdwg.mxu0
    %v1883 = vadd.f32 %v1810, %v1880
    %v1884 = vxor.u32 %v1809, 2147483648
    %v1885 = vmul.f32 %v1884, 1.442695
    %v1886 = vpow.pop %v1885
    %v1887 = vadd.f32 %v1886, 1.0
    %v1888 = vrcp.pop %v1887
    %v1889 = vmul.f32 1.0, %v1888
    %v1890 = vtanh.pop %v1809
    %v1891 = vmul.f32 %v1889, %v1695
    %1893 = vrot.lane.b32.xlu0 %v1890, 32
    %v1894 = vpop.permute.xlu0 %1893
    %v1896 = vmul.f32 %v1889, %v1894
    %1898 = vrot.lane.b32.xlu0 %v1896, 32
    %v1899 = vpop.permute.xlu0 %1898
    %v1901 = vadd.f32 %v1891, %v1899
    %v1902 = vtanh.pop %v1901
    %1904 = vrot.lane.b32.xlu0 %v1902, 32
    %v1905 = vpop.permute.xlu0 %1904
    %v1907 = vmul.f32 %v1889, %v1905
    %v1908 = vxor.u32 %v1883, 2147483648
    %v1909 = vmul.f32 %v1908, 1.442695
    %v1910 = vpow.pop %v1909
    %v1911 = vadd.f32 %v1910, 1.0
    %v1912 = vrcp.pop %v1911
    %v1913 = vmul.f32 1.0, %v1912
    %v1914 = vtanh.pop %v1883
    %v1915 = vmul.f32 %v1913, %v1719
    %1917 = vrot.lane.b32.xlu0 %v1914, 32
    %v1918 = vpop.permute.xlu0 %1917
    %v1920 = vmul.f32 %v1913, %v1918
    %1922 = vrot.lane.b32.xlu0 %v1920, 32
    %v1923 = vpop.permute.xlu0 %1922
    %v1925 = vadd.f32 %v1915, %v1923
    %v1926 = vtanh.pop %v1925
    %1928 = vrot.lane.b32.xlu0 %v1926, 32
    %v1929 = vpop.permute.xlu0 %1928
    %v1931 = vmul.f32 %v1913, %v1929
    %1933 = vrot.lane.b32.xlu0 %v1907, 64
    %v1934 = vpop.permute.xlu0 %1933
    %1936 = vst.msk [vmem:[#allocation4 + $0xe] sm:$0x3] %vm493, %v1934
    %1938 = vrot.lane.b32.xlu0 %v1931, 64
    %v1939 = vpop.permute.xlu0 %1938
    %1941 = vst.msk [vmem:[#allocation5] sm:$0x3] %vm493, %v1939
    %v1942 = vld [vmem:[#allocation4] sm:$0xff]
    %v1943 = vld [vmem:[#allocation4 + $0x8] sm:$0xff]
    %v1944 = vmax.f32 %v1942, 0.0
    %v1945 = vmax.f32 %v1943, 0.0
    %v1946 = vld [vmem:[#allocation5] sm:$0xff]
    %v1947 = vld [vmem:[#allocation5 + $0x8] sm:$0xff]
    %v1948 = vmax.f32 %v1946, 0.0
    %v1949 = vmax.f32 %v1947, 0.0
    %v1950 = vld [vmem:[%s7] sm:$0xff]
    %v1951 = vld [vmem:[%s7 + $0x8] sm:$0xff]
    %v1952 = vld [vmem:[%s7 + $0x10] sm:$0xff]
    %v1953 = vld [vmem:[%s7 + $0x18] sm:$0xff]
    %v1954 = vld [vmem:[%s8] sm:$0xff]
    %v1955 = vld [vmem:[%s8 + $0x8] sm:$0xff]
    %v1956 = vld [vmem:[%s8 + $0x10] sm:$0xff]
    %v1957 = vld [vmem:[%s8 + $0x18] sm:$0xff]
    %v1959 = vsel %vm294, %v1948, 0
    %v1962 = vsel %vm294, %v1949, 0
    %1964 = vmatprep.subr.mxu0 0.0
    %1965 = vmatpush1.msra.mxu0 %v1954
    %1966 = vmatprep.subr.mxu0 0.0
    %1967 = vmatpush1.msra.mxu0 %v1955
    %1968 = vmatprep.subr.mxu0 0.0
    %1969 = vmatpush1.msra.mxu0 %v1956
    %1970 = vmatprep.subr.mxu0 0.0
    %1971 = vmatpush1.msra.mxu0 %v1957
    %1972 = vmatprep.subr.mxu0 0.0
    %1973 = vmatpush1.msra.mxu0 0.0
    %1974 = vmatprep.subr.mxu0 0.0
    %1975 = vmatpush1.msra.mxu0 0.0
    %1976 = vmatprep.subr.mxu0 0.0
    %1977 = vmatpush1.msra.mxu0 0.0
    %1978 = vmatprep.subr.mxu0 0.0
    %1979 = vmatpush1.msra.mxu0 0.0
    %1980 = vmatprep.subr.mxu0 0.0
    %1981 = vmatpush1.msra.mxu0 0.0
    %1982 = vmatprep.subr.mxu0 0.0
    %1983 = vmatpush1.msra.mxu0 0.0
    %1984 = vmatprep.subr.mxu0 0.0
    %1985 = vmatpush1.msra.mxu0 0.0
    %1986 = vmatprep.subr.mxu0 0.0
    %1987 = vmatpush1.msra.mxu0 0.0
    %1988 = vmatprep.subr.mxu0 0.0
    %1989 = vmatpush1.msra.mxu0 0.0
    %1990 = vmatprep.subr.mxu0 0.0
    %1991 = vmatpush1.msra.mxu0 0.0
    %1992 = vmatprep.subr.mxu0 0.0
    %1993 = vmatpush1.msra.mxu0 0.0
    %1994 = vmatprep.subr.mxu0 0.0
    %1995 = vmatpush1.msra.mxu0 0.0
    %1996 = vmatprep.subr.mxu0 0.0
    %1997 = vmatpush1.msra.mxu0 0.0
    %1998 = vmatprep.subr.mxu0 0.0
    %1999 = vmatpush1.msra.mxu0 0.0
    %2000 = vmatprep.subr.mxu0 0.0
    %2001 = vmatpush1.msra.mxu0 0.0
    %2002 = vmatprep.subr.mxu0 0.0
    %2003 = vmatpush1.msra.mxu0 0.0
    %2004 = vmatprep.subr.mxu0 0.0
    %2005 = vmatpush1.msra.mxu0 0.0
    %2006 = vmatprep.subr.mxu0 0.0
    %2007 = vmatpush1.msra.mxu0 0.0
    %2008 = vmatprep.subr.mxu0 0.0
    %2009 = vmatpush1.msra.mxu0 0.0
    %2010 = vmatprep.subr.mxu0 0.0
    %2011 = vmatpush1.msra.mxu0 0.0
    %2012 = vmatprep.subr.mxu0 0.0
    %2013 = vmatpush1.msra.mxu0 0.0
    %2014 = vmatprep.subr.mxu0 0.0
    %2015 = vmatpush1.msra.mxu0 0.0
    %2016 = vmatprep.subr.mxu0 0.0
    %2017 = vmatpush1.msra.mxu0 0.0
    %2018 = vmatprep.subr.mxu0 0.0
    %2019 = vmatpush1.msra.mxu0 0.0
    %2020 = vmatprep.subr.mxu0 0.0
    %2021 = vmatpush1.msra.mxu0 0.0
    %2022 = vmatprep.subr.mxu0 0.0
    %2023 = vmatpush1.msra.mxu0 0.0
    %2024 = vmatprep.subr.mxu0 0.0
    %2025 = vmatpush1.msra.mxu0 0.0
    %2026 = vmatprep.subr.mxu0 0.0
    %2027 = vmatpush1.msra.mxu0 0.0
    %2028 = vmatprep.mubr.f32.mxu0 0.0
    %2029 = vmatmul.mubr.f32.gmra.mrb[0].mxu0 %v1959
    %v2030 = vpop.f32.mrb[0].mxu0
    %v2031 = vadd.f32 0.0, %v2030
    %v2032 = vpop.f32.mrb[0].mxu0
    %2033 = vmatprep.mubr.f32.mxu0 0.0
    %2034 = vmatmul.mubr.f32.gmra.mrb[0].mxu0 %v1962
    %v2035 = vpop.f32.mrb[0].mxu0
    %v2036 = vadd.f32 0.0, %v2035
    %v2037 = vpop.f32.mrb[0].mxu0
    %2038 = vdwg.mxu0
    %v2040 = vsel %vm294, %v1944, 0
    %v2043 = vsel %vm294, %v1945, 0
    %2045 = vmatprep.subr.mxu0 0.0
    %2046 = vmatpush1.msra.mxu0 %v1950
    %2047 = vmatprep.subr.mxu0 0.0
    %2048 = vmatpush1.msra.mxu0 %v1951
    %2049 = vmatprep.subr.mxu0 0.0
    %2050 = vmatpush1.msra.mxu0 %v1952
    %2051 = vmatprep.subr.mxu0 0.0
    %2052 = vmatpush1.msra.mxu0 %v1953
    %2053 = vmatprep.subr.mxu0 0.0
    %2054 = vmatpush1.msra.mxu0 0.0
    %2055 = vmatprep.subr.mxu0 0.0
    %2056 = vmatpush1.msra.mxu0 0.0
    %2057 = vmatprep.subr.mxu0 0.0
    %2058 = vmatpush1.msra.mxu0 0.0
    %2059 = vmatprep.subr.mxu0 0.0
    %2060 = vmatpush1.msra.mxu0 0.0
    %2061 = vmatprep.subr.mxu0 0.0
    %2062 = vmatpush1.msra.mxu0 0.0
    %2063 = vmatprep.subr.mxu0 0.0
    %2064 = vmatpush1.msra.mxu0 0.0
    %2065 = vmatprep.subr.mxu0 0.0
    %2066 = vmatpush1.msra.mxu0 0.0
    %2067 = vmatprep.subr.mxu0 0.0
    %2068 = vmatpush1.msra.mxu0 0.0
    %2069 = vmatprep.subr.mxu0 0.0
    %2070 = vmatpush1.msra.mxu0 0.0
    %2071 = vmatprep.subr.mxu0 0.0
    %2072 = vmatpush1.msra.mxu0 0.0
    %2073 = vmatprep.subr.mxu0 0.0
    %2074 = vmatpush1.msra.mxu0 0.0
    %2075 = vmatprep.subr.mxu0 0.0
    %2076 = vmatpush1.msra.mxu0 0.0
    %2077 = vmatprep.subr.mxu0 0.0
    %2078 = vmatpush1.msra.mxu0 0.0
    %2079 = vmatprep.subr.mxu0 0.0
    %2080 = vmatpush1.msra.mxu0 0.0
    %2081 = vmatprep.subr.mxu0 0.0
    %2082 = vmatpush1.msra.mxu0 0.0
    %2083 = vmatprep.subr.mxu0 0.0
    %2084 = vmatpush1.msra.mxu0 0.0
    %2085 = vmatprep.subr.mxu0 0.0
    %2086 = vmatpush1.msra.mxu0 0.0
    %2087 = vmatprep.subr.mxu0 0.0
    %2088 = vmatpush1.msra.mxu0 0.0
    %2089 = vmatprep.subr.mxu0 0.0
    %2090 = vmatpush1.msra.mxu0 0.0
    %2091 = vmatprep.subr.mxu0 0.0
    %2092 = vmatpush1.msra.mxu0 0.0
    %2093 = vmatprep.subr.mxu0 0.0
    %2094 = vmatpush1.msra.mxu0 0.0
    %2095 = vmatprep.subr.mxu0 0.0
    %2096 = vmatpush1.msra.mxu0 0.0
    %2097 = vmatprep.subr.mxu0 0.0
    %2098 = vmatpush1.msra.mxu0 0.0
    %2099 = vmatprep.subr.mxu0 0.0
    %2100 = vmatpush1.msra.mxu0 0.0
    %2101 = vmatprep.subr.mxu0 0.0
    %2102 = vmatpush1.msra.mxu0 0.0
    %2103 = vmatprep.subr.mxu0 0.0
    %2104 = vmatpush1.msra.mxu0 0.0
    %2105 = vmatprep.subr.mxu0 0.0
    %2106 = vmatpush1.msra.mxu0 0.0
    %2107 = vmatprep.subr.mxu0 0.0
    %2108 = vmatpush1.msra.mxu0 0.0
    %2109 = vmatprep.mubr.f32.mxu0 0.0
    %2110 = vmatmul.mubr.f32.gmra.mrb[0].mxu0 %v2040
    %v2111 = vpop.f32.mrb[0].mxu0
    %v2112 = vadd.f32 %v2031, %v2111
    %v2113 = vpop.f32.mrb[0].mxu0
    %2114 = vmatprep.mubr.f32.mxu0 0.0
    %2115 = vmatmul.mubr.f32.gmra.mrb[0].mxu0 %v2043
    %v2116 = vpop.f32.mrb[0].mxu0
    %v2117 = vadd.f32 %v2036, %v2116
    %v2118 = vpop.f32.mrb[0].mxu0
    %2119 = vdwg.mxu0
    %v2120 = vld [vmem:[%s9] sm:$0x1]
    %v2122 = vlaneseq
    %v2123 = vshrl.u32 %v2122, 7
    %v2124 = vsub.s32 0, %v2123
    %v2125 = vrot.slane %v2120, %v2124
    %v2127 = vadd.f32 %v2112, %v2125
    %v2128 = vadd.f32 %v2117, %v2125
    %vm2129 = vcmask 48128
    %v2130 = vsel %vm2129, %v2127, -inf
    %2131 = vmax.xlane.f32.xlu0 %v2130
    %v2132 = vpop.xlane.xlu0 %2131
    %v2133 = vsel %vm2129, %v2128, -inf
    %2134 = vmax.xlane.f32.xlu0 %v2133
    %v2135 = vpop.xlane.xlu0 %2134
    %v2136 = vsub.f32 %v2127, %v2132
    %v2137 = vsub.f32 %v2128, %v2135
    %v2138 = vmul.f32 %v2136, 1.442695
    %v2139 = vpow.pop %v2138
    %v2140 = vmul.f32 %v2137, 1.442695
    %v2141 = vpow.pop %v2140
    %v2142 = vsel %vm2129, %v2139, 0.0
    %2143 = vadd.xlane.f32.xlu0 %v2142
    %v2144 = vpop.xlane.xlu0 %2143
    %v2145 = vsel %vm2129, %v2141, 0.0
    %2146 = vadd.xlane.f32.xlu0 %v2145
    %v2147 = vpop.xlane.xlu0 %2146
    %v2148 = vrcp.pop %v2144
    %v2149 = vmul.f32 %v2139, %v2148
    %v2150 = vrcp.pop %v2147
    %v2151 = vmul.f32 %v2141, %v2150
    %2152 = vst.msk [vmem:[%s10] sm:$0xff] %vm2129, %v2149
    %2153 = vst.msk [vmem:[%s10 + $0x8] sm:$0xff] %vm2129, %v2151
    // Predicated region
    $region54: #{tpu_custom_call.1} parent=1 // pred_check
      _
    $region55: #{tpu_custom_call.1} parent=1 // pred_check_branch
      %2155 = sbr.rel (0) target = $region57
    $region56: #{tpu_custom_call.1} parent=1 // pred_region
      _
    $region57: #{tpu_custom_call.1} parent=1 // pred_fallthru
      _
    // Predicated region
    $region58: #{tpu_custom_call.1} parent=1 // pred_check
      _
    $region59: #{tpu_custom_call.1} parent=1 // pred_check_branch
      %2157 = sbr.rel (0) target = $region61
    $region60: #{tpu_custom_call.1} parent=1 // pred_region
      _
    $region61: #{tpu_custom_call.1} parent=1 // pred_fallthru
      _
    %2158 = vsyncpa [#allocation7], 1
    %2159 = vsyncpa [#allocation9], 1

</llo_original>
